<compile_context>
chip_gen: v7x
topology: tpu7x:2x2x1
jax: 0.10.0
libtpu: 0.0.40
codegen_flags: <defaults>
</compile_context>

<pallas_src>
import functools

import jax
import jax.numpy as jnp
from jax import lax
from jax.experimental import pallas as pl
from jax.experimental.pallas import tpu as pltpu


def _bidir_conv3d_kernel(xph_ref, w_ref, b_ref, out_ref, *,
                         td, ho, kd_taps, dil, kdim, lanes):
    """xph_ref : (Dp, Ho, Kh*W*Cin)   one sample's padded volume, H im2col'd (bf16)
       w_ref   : (Kd, Kh*W*Cin, lanes) combined block-Toeplitz weights (bf16)
       b_ref   : (1, lanes)            combined bias (f32)
       out_ref : (Td*Ho, lanes)        lane-dense output tile (x dtype)"""
    dt = pl.program_id(1)                           # depth-tile index
    # accumulator starts from the bias; (1, lanes) broadcasts on the first add
    acc = b_ref[...].astype(jnp.float32)
    # Kd taps; each tap is ONE MXU matmul with K = Kh*W*Cin.  Slicing only the
    # leading (untiled) depth axis -> no sublane realignment work.
    for kd in range(kd_taps):
        lhs = xph_ref[pl.ds(dt * td + kd * dil, td), :, :].reshape(td * ho, kdim)
        acc = acc + jnp.dot(lhs, w_ref[kd, :, :],
                            preferred_element_type=jnp.float32)
    out_ref[...] = acc.astype(out_ref.dtype)


def _pick_depth_tile(do, ho, target_rows=256):
    """Largest divisor of Do with Td*Ho <= target_rows and Td*Ho % 8 == 0."""
    for t in range(do, 0, -1):
        if do % t == 0 and t * ho <= target_rows and (t * ho) % 8 == 0:
            return t
    return 1 if (ho % 8 == 0) else do   # full-depth block is always layout-legal


@functools.partial(jax.jit, static_argnames=("padding", "dilation"))
def bidirectional_conv3d(x, wf, bf, wr, br, *, padding, dilation):
    """x: (N, Cin, D, H, W); wf/wr: (Cout, Cin, Kd, Kh, Kw); bf/br: (Cout,)."""
    N, Cin, D, H, W = x.shape
    Cout, _, Kd, Kh, Kw = wf.shape
    p, dil = int(padding), int(dilation)
    assert p >= 0 and dil >= 1

    Do = D + 2 * p - dil * (Kd - 1)
    Ho = H + 2 * p - dil * (Kh - 1)
    Wo = W + 2 * p - dil * (Kw - 1)
    assert Do > 0 and Ho > 0 and Wo > 0
    Dp, Hp = D + 2 * p, H + 2 * p

    cdt = jnp.bfloat16                               # MXU operand dtype

    # ---- fold the reverse branch into the forward weights (stride 1, symmetric
    #      padding):  flip_d(conv(flip_d(x), Wr)) == conv(x, flip_kd(Wr)) -------
    wc = wf + jnp.flip(wr, axis=2)
    bc = (bf + br).astype(jnp.float32)

    # ---- input: channels-last, pad D/H, fold (W,Cin) into lanes, im2col Kh ----
    x_cl = jnp.transpose(x, (0, 2, 3, 4, 1))         # N, D, H, W, Cin
    xp = jnp.pad(x_cl, ((0, 0), (p, p), (p, p), (0, 0), (0, 0)))
    xp = xp.reshape(N, Dp, Hp, W * Cin)
    # xph[n, d, ho, kh*(W*Cin)+j] = xp[n, d, ho + kh*dil, j]
    xph = jnp.concatenate(
        [xp[:, :, kh * dil: kh * dil + Ho, :] for kh in range(Kh)], axis=-1)
    xph = xph.astype(cdt)                            # (N, Dp, Ho, Kh*W*Cin)

    # ---- block-Toeplitz weights over W, Kh folded into the contraction dim ----
    # Built in f32 (no 7-D intermediate: einsum contracts kw), cast to bf16 once.
    wc_perm = jnp.transpose(wc, (2, 3, 4, 1, 0)).astype(jnp.float32)  # Kd,Kh,Kw,Cin,Cout
    wi = jnp.arange(W)[None, :, None]
    wo_i = jnp.arange(Wo)[None, None, :]
    kw_i = jnp.arange(Kw)[:, None, None]
    shift = (wi == wo_i + kw_i * dil - p).astype(jnp.float32)          # (Kw, W, Wo)
    wtap = jnp.einsum('kxw,dhkcf->dhxcwf', shift, wc_perm,
                      precision=lax.Precision.HIGHEST)                 # Kd,Kh,W,Cin,Wo,Cout

    kdim = Kh * W * Cin
    lanes = Wo * Cout
    lanes_p = ((lanes + 127) // 128) * 128           # pad lane axis to full vst width
    wbig = wtap.reshape(Kd, kdim, lanes)
    brow = jnp.tile(bc, Wo).reshape(1, lanes)
    if lanes_p != lanes:
        wbig = jnp.pad(wbig, ((0, 0), (0, 0), (0, lanes_p - lanes)))
        brow = jnp.pad(brow, ((0, 0), (0, lanes_p - lanes)))
    wbig = wbig.astype(cdt)

    Td = _pick_depth_tile(Do, Ho)                    # M = Td*Ho ~ 256 rows
    n_dt = Do // Td

    kernel = functools.partial(
        _bidir_conv3d_kernel, td=Td, ho=Ho, kd_taps=Kd, dil=dil,
        kdim=kdim, lanes=lanes_p)

    # ---- VMEM budget from actual (double-buffered) block sizes ----------------
    bs_in = jnp.dtype(cdt).itemsize
    bs_out = jnp.dtype(x.dtype).itemsize
    in_bytes = Dp * Ho * kdim * bs_in
    w_bytes = Kd * kdim * lanes_p * bs_in
    b_bytes = lanes_p * 4
    out_bytes = Td * Ho * lanes_p * bs_out
    vmem_limit = min(2 * (in_bytes + w_bytes + b_bytes + out_bytes) + (8 << 20),
                     64 << 20)

    cost = pl.CostEstimate(
        flops=2 * N * Kd * Do * Ho * kdim * lanes_p,
        transcendentals=0,
        bytes_accessed=(N * Dp * Ho * kdim * bs_in + Kd * kdim * lanes_p * bs_in
                        + b_bytes + N * Do * Ho * lanes_p * bs_out))

    out = pl.pallas_call(
        kernel,
        out_shape=jax.ShapeDtypeStruct((N, Do * Ho, lanes_p), x.dtype),
        grid_spec=pltpu.PrefetchScalarGridSpec(
            num_scalar_prefetch=0,
            grid=(N, n_dt),
            in_specs=[
                # whole padded volume of sample n; constant along dt -> fetched
                # once per sample and reused across depth tiles.
                pl.BlockSpec((None, Dp, Ho, kdim), lambda n, dt: (n, 0, 0, 0)),
                pl.BlockSpec((Kd, kdim, lanes_p), lambda n, dt: (0, 0, 0)),
                pl.BlockSpec((1, lanes_p), lambda n, dt: (0, 0)),
            ],
            out_specs=pl.BlockSpec((None, Td * Ho, lanes_p),
                                   lambda n, dt: (n, dt, 0)),
        ),
        # dt marked "arbitrary": any megacore sharding lands on the sample axis,
        # preserving per-sample volume DMA reuse (v7x).
        compiler_params=pltpu.CompilerParams(
            dimension_semantics=("parallel", "arbitrary"),
            vmem_limit_bytes=int(vmem_limit)),
        cost_estimate=cost,
    )(xph, wbig, brow)

    out = out[..., :lanes].reshape(N, Do, Ho, Wo, Cout)
    return jnp.transpose(out, (0, 4, 1, 2, 3))       # N, Cout, D, H, W


# ----------------------- pure-JAX reference (for checking) -----------------------
def _conv3d_ref(x, w, b, padding, dilation):
    out = lax.conv_general_dilated(
        x, w, window_strides=(1, 1, 1),
        padding=[(padding, padding)] * 3,
        rhs_dilation=(dilation,) * 3,
        dimension_numbers=('NCDHW', 'OIDHW', 'NCDHW'),
        precision=lax.Precision.HIGHEST)
    return out + b.reshape(1, -1, 1, 1, 1)


def _bidir_ref(x, wf, bf, wr, br, padding, dilation):
    fwd = _conv3d_ref(x, wf, bf, padding, dilation)
    rev = _conv3d_ref(jnp.flip(x, axis=2), wr, br, padding, dilation)
    return fwd + jnp.flip(rev, axis=2)


if __name__ == "__main__":
    import numpy as np

    N, Cin, Cout = 2, 4, 8
    D = H = W = 16                      # -> Wo*Cout = 128 (lane-dense output)
    K, padding, dilation = 3, 1, 1

    key = jax.random.PRNGKey(0)
    k1, k2, k3, k4, k5 = jax.random.split(key, 5)

    fan_in = Cin * K * K * K
    std = (2.0 / fan_in) ** 0.5          # kaiming_normal_ (fan_in, sqrt(2) gain)
    bound = 1.0 / fan_in ** 0.5          # default nn.Conv3d bias init range
    wf = jax.random.normal(k1, (Cout, Cin, K, K, K), jnp.float32) * std
    wr = jax.random.normal(k2, (Cout, Cin, K, K, K), jnp.float32) * std
    bf = jax.random.uniform(k3, (Cout,), jnp.float32, -bound, bound)
    br = jax.random.uniform(k4, (Cout,), jnp.float32, -bound, bound)
    x = jax.random.normal(k5, (N, Cin, D, H, W), jnp.float32)

    out = bidirectional_conv3d(x, wf, bf, wr, br, padding=padding, dilation=dilation)
    out = jax.block_until_ready(out)

    ref = _bidir_ref(x, wf, bf, wr, br, padding, dilation)
    assert out.shape == ref.shape, (out.shape, ref.shape)
    # bf16 MXU operands (rel. rounding ~2^-8 per operand) over ~108-term sums of
    # O(1) values give ~6e-3 RMS / ~3e-2 worst-case absolute error vs the f32
    # HIGHEST-precision reference; 5e-2 keeps margin while still catching any
    # structural (tap/shift/bias) error, which would be O(0.1-1).
    np.testing.assert_allclose(np.asarray(out), np.asarray(ref), atol=5e-2, rtol=5e-2)
    print("KERNEL_OK")
</pallas_src>

<mosaic_0001>
module attributes {stable_mosaic.version = 11 : i64} {
  func.func @_bidir_conv3d_kernel(%arg0: i32, %arg1: i32, %arg2: memref<1x18x16x192xbf16, #tpu.memory_space<vmem>>, %arg3: memref<3x192x128xbf16, #tpu.memory_space<vmem>>, %arg4: memref<1x128xf32, #tpu.memory_space<vmem>>, %arg5: memref<1x256x128xf32, #tpu.memory_space<vmem>>) attributes {dimension_semantics = [#tpu.dimension_semantics<parallel>, #tpu.dimension_semantics<arbitrary>], iteration_bounds = array<i64: 2, 1>, scalar_prefetch = 0 : i64, scratch_operands = 0 : i64, tpu.core_type = #tpu.core_type<tc>, window_params = [{transform_indices = @transform_0, window_bounds = array<i64: 1, 18, 16, 192>}, {pipeline_mode = #tpu.pipeline_mode<synchronous>, transform_indices = @transform_1, window_bounds = array<i64: 3, 192, 128>}, {pipeline_mode = #tpu.pipeline_mode<synchronous>, transform_indices = @transform_2, window_bounds = array<i64: 1, 128>}, {transform_indices = @transform_3, window_bounds = array<i64: 1, 256, 128>}]} {
    %c0 = arith.constant 0 : index
    %c0_0 = arith.constant 0 : index
    %0 = vector.load %arg4[%c0, %c0_0] : memref<1x128xf32, #tpu.memory_space<vmem>>, vector<1x128xf32>
    %c16_i32 = arith.constant 16 : i32
    %1 = arith.muli %arg1, %c16_i32 : i32
    %c0_i32 = arith.constant 0 : i32
    %2 = arith.addi %1, %c0_i32 : i32
    %c0_1 = arith.constant 0 : index
    %3 = arith.index_cast %2 : i32 to index
    %c0_2 = arith.constant 0 : index
    %c0_3 = arith.constant 0 : index
    %4 = vector.load %arg2[%c0_1, %3, %c0_2, %c0_3] : memref<1x18x16x192xbf16, #tpu.memory_space<vmem>>, vector<1x16x16x192xbf16>
    %5 = vector.shape_cast %4 : vector<1x16x16x192xbf16> to vector<16x16x192xbf16>
    %6 = vector.shape_cast %5 : vector<16x16x192xbf16> to vector<256x192xbf16>
    %c0_4 = arith.constant 0 : index
    %c0_5 = arith.constant 0 : index
    %c0_6 = arith.constant 0 : index
    %7 = vector.load %arg3[%c0_4, %c0_5, %c0_6] : memref<3x192x128xbf16, #tpu.memory_space<vmem>>, vector<1x192x128xbf16>
    %8 = vector.shape_cast %7 : vector<1x192x128xbf16> to vector<192x128xbf16>
    %cst = arith.constant dense<0.000000e+00> : vector<256x128xf32>
    %9 = tpu.matmul %6, %8, %cst {dimension_numbers = #tpu.dot_dimension_numbers<[1], [0], [0], [1], [0, 0, 1, 1], [], []>} : vector<256x192xbf16>, vector<192x128xbf16>, vector<256x128xf32> -> vector<256x128xf32>
    %10 = vector.broadcast %0 : vector<1x128xf32> to vector<256x128xf32>
    %11 = arith.addf %10, %9 : vector<256x128xf32>
    %c16_i32_7 = arith.constant 16 : i32
    %12 = arith.muli %arg1, %c16_i32_7 : i32
    %c1_i32 = arith.constant 1 : i32
    %13 = arith.addi %12, %c1_i32 : i32
    %c0_8 = arith.constant 0 : index
    %14 = arith.index_cast %13 : i32 to index
    %c0_9 = arith.constant 0 : index
    %c0_10 = arith.constant 0 : index
    %15 = vector.load %arg2[%c0_8, %14, %c0_9, %c0_10] : memref<1x18x16x192xbf16, #tpu.memory_space<vmem>>, vector<1x16x16x192xbf16>
    %16 = vector.shape_cast %15 : vector<1x16x16x192xbf16> to vector<16x16x192xbf16>
    %17 = vector.shape_cast %16 : vector<16x16x192xbf16> to vector<256x192xbf16>
    %c1 = arith.constant 1 : index
    %c0_11 = arith.constant 0 : index
    %c0_12 = arith.constant 0 : index
    %18 = vector.load %arg3[%c1, %c0_11, %c0_12] : memref<3x192x128xbf16, #tpu.memory_space<vmem>>, vector<1x192x128xbf16>
    %19 = vector.shape_cast %18 : vector<1x192x128xbf16> to vector<192x128xbf16>
    %cst_13 = arith.constant dense<0.000000e+00> : vector<256x128xf32>
    %20 = tpu.matmul %17, %19, %cst_13 {dimension_numbers = #tpu.dot_dimension_numbers<[1], [0], [0], [1], [0, 0, 1, 1], [], []>} : vector<256x192xbf16>, vector<192x128xbf16>, vector<256x128xf32> -> vector<256x128xf32>
    %21 = arith.addf %11, %20 : vector<256x128xf32>
    %c16_i32_14 = arith.constant 16 : i32
    %22 = arith.muli %arg1, %c16_i32_14 : i32
    %c2_i32 = arith.constant 2 : i32
    %23 = arith.addi %22, %c2_i32 : i32
    %c0_15 = arith.constant 0 : index
    %24 = arith.index_cast %23 : i32 to index
    %c0_16 = arith.constant 0 : index
    %c0_17 = arith.constant 0 : index
    %25 = vector.load %arg2[%c0_15, %24, %c0_16, %c0_17] : memref<1x18x16x192xbf16, #tpu.memory_space<vmem>>, vector<1x16x16x192xbf16>
    %26 = vector.shape_cast %25 : vector<1x16x16x192xbf16> to vector<16x16x192xbf16>
    %27 = vector.shape_cast %26 : vector<16x16x192xbf16> to vector<256x192xbf16>
    %c2 = arith.constant 2 : index
    %c0_18 = arith.constant 0 : index
    %c0_19 = arith.constant 0 : index
    %28 = vector.load %arg3[%c2, %c0_18, %c0_19] : memref<3x192x128xbf16, #tpu.memory_space<vmem>>, vector<1x192x128xbf16>
    %29 = vector.shape_cast %28 : vector<1x192x128xbf16> to vector<192x128xbf16>
    %cst_20 = arith.constant dense<0.000000e+00> : vector<256x128xf32>
    %30 = tpu.matmul %27, %29, %cst_20 {dimension_numbers = #tpu.dot_dimension_numbers<[1], [0], [0], [1], [0, 0, 1, 1], [], []>} : vector<256x192xbf16>, vector<192x128xbf16>, vector<256x128xf32> -> vector<256x128xf32>
    %31 = arith.addf %21, %30 : vector<256x128xf32>
    %c0_21 = arith.constant 0 : index
    %c0_22 = arith.constant 0 : index
    %c0_23 = arith.constant 0 : index
    %32 = vector.load %arg5[%c0_21, %c0_22, %c0_23] : memref<1x256x128xf32, #tpu.memory_space<vmem>>, vector<1x256x128xf32>
    %33 = vector.shape_cast %32 : vector<1x256x128xf32> to vector<256x128xf32>
    %34 = vector.shape_cast %31 : vector<256x128xf32> to vector<1x256x128xf32>
    tpu.vector_store %arg5[%c0_21, %c0_22, %c0_23], %34 {strides = array<i32>} : memref<1x256x128xf32, #tpu.memory_space<vmem>>, vector<1x256x128xf32>,
    return
  }
  func.func @transform_0(%arg0: i32, %arg1: i32) -> (i32, i32, i32, i32) {
    %c0_i32 = arith.constant 0 : i32
    %c0_i32_0 = arith.constant 0 : i32
    %c0_i32_1 = arith.constant 0 : i32
    %c0_i32_2 = arith.constant 0 : i32
    return %arg0, %c0_i32, %c0_i32_0, %c0_i32_1 : i32, i32, i32, i32
  }
  func.func @transform_1(%arg0: i32, %arg1: i32) -> (i32, i32, i32) {
    %c0_i32 = arith.constant 0 : i32
    %c0_i32_0 = arith.constant 0 : i32
    %c0_i32_1 = arith.constant 0 : i32
    %c0_i32_2 = arith.constant 0 : i32
    return %c0_i32, %c0_i32_0, %c0_i32_1 : i32, i32, i32
  }
  func.func @transform_2(%arg0: i32, %arg1: i32) -> (i32, i32) {
    %c0_i32 = arith.constant 0 : i32
    %c0_i32_0 = arith.constant 0 : i32
    %c0_i32_1 = arith.constant 0 : i32
    return %c0_i32, %c0_i32_0 : i32, i32
  }
  func.func @transform_3(%arg0: i32, %arg1: i32) -> (i32, i32, i32) {
    %c0_i32 = arith.constant 0 : i32
    %c0_i32_0 = arith.constant 0 : i32
    return %arg0, %arg1, %c0_i32 : i32, i32, i32
  }
}

</mosaic_0001>

<llo_original>
// kernel: tile.8
$region0: #{tile.8}
  #allocation0 [shape = 's32[1]{0}', space=sflag, size = 0x4, scoped, tag = 'scoped memory for tile.8']
  %s0 = inlined_call_operand.vmem [shape: f32[8], index: 0, kind: input, shape index: {}]
  %s1 = inlined_call_operand.vmem [shape: f32[16,8], index: 1, kind: output, shape index: {}]
  // Predicated region
  $region2: #{tile.8} parent=0 // pred_check
    _
  $region3: #{tile.8} parent=0 // pred_check_branch
    %3 = sbr.rel (0) target = $region5
  $region4: #{tile.8} parent=0 // pred_region
    _
  $region5: #{tile.8} parent=0 // pred_fallthru
    _
  %v4 = vld [vmem:[%s0] ss:$0 sm:$0xff]
  %5 = vst [vmem:[%s1] sm:$0xff] %v4
  %s6 = scalar_lea.vmem %s1, 8
  %7 = vst [vmem:[%s6] sm:$0xff] %v4

// kernel: tile.9
$region0: #{tile.9}
  %s0 = inlined_call_operand.vmem [shape: f32[16,8], index: 0, kind: input, shape index: {}]
  %s1 = inlined_call_operand.vmem [shape: f32[1,128], index: 1, kind: output, shape index: {}]
  $region1: #{tile.9} parent=0
    #allocation0 [shape = 'u8[4096]{0}', space=vmem, size = 0x1000, scoped, tag = 'scoped mem for output reshape']
    %v2 = vld [vmem:[%s0] sm:$0x1]
    %vm3 = vcmask 64512
    %4 = vst.msk [vmem:[#allocation0] sm:$0x1] %vm3, %v2
    %s5 = scalar_lea.vmem %s0, 15
    %v6 = vld [vmem:[%s5] sm:$0x1]
    %7 = vrot.lane.b32.xlu0 %v6, 120
    %v8 = vpop.permute.xlu0 %7
    %vm9 = vcmask 1048512
    %10 = vst.msk [vmem:[#allocation0] sm:$0x1] %vm9, %v8
    %s11 = scalar_lea.vmem %s0, 14
    %v12 = vld [vmem:[%s11] sm:$0x1]
    %13 = vrot.lane.b32.xlu0 %v12, 112
    %v14 = vpop.permute.xlu0 %13
    %vm15 = vcmask 982912
    %16 = vst.msk [vmem:[#allocation0] sm:$0x1] %vm15, %v14
    %s17 = scalar_lea.vmem %s0, 13
    %v18 = vld [vmem:[%s17] sm:$0x1]
    %19 = vrot.lane.b32.xlu0 %v18, 104
    %v20 = vpop.permute.xlu0 %19
    %vm21 = vcmask 917312
    %22 = vst.msk [vmem:[#allocation0] sm:$0x1] %vm21, %v20
    %s23 = scalar_lea.vmem %s0, 12
    %v24 = vld [vmem:[%s23] sm:$0x1]
    %25 = vrot.lane.b32.xlu0 %v24, 96
    %v26 = vpop.permute.xlu0 %25
    %vm27 = vcmask 851712
    %28 = vst.msk [vmem:[#allocation0] sm:$0x1] %vm27, %v26
    %s29 = scalar_lea.vmem %s0, 11
    %v30 = vld [vmem:[%s29] sm:$0x1]
    %31 = vrot.lane.b32.xlu0 %v30, 88
    %v32 = vpop.permute.xlu0 %31
    %vm33 = vcmask 786112
    %34 = vst.msk [vmem:[#allocation0] sm:$0x1] %vm33, %v32
    %s35 = scalar_lea.vmem %s0, 10
    %v36 = vld [vmem:[%s35] sm:$0x1]
    %37 = vrot.lane.b32.xlu0 %v36, 80
    %v38 = vpop.permute.xlu0 %37
    %vm39 = vcmask 720512
    %40 = vst.msk [vmem:[#allocation0] sm:$0x1] %vm39, %v38
    %s41 = scalar_lea.vmem %s0, 9
    %v42 = vld [vmem:[%s41] sm:$0x1]
    %43 = vrot.lane.b32.xlu0 %v42, 72
    %v44 = vpop.permute.xlu0 %43
    %vm45 = vcmask 654912
    %46 = vst.msk [vmem:[#allocation0] sm:$0x1] %vm45, %v44
    %s47 = scalar_lea.vmem %s0, 8
    %v48 = vld [vmem:[%s47] sm:$0x1]
    %49 = vrot.lane.b32.xlu0 %v48, 64
    %v50 = vpop.permute.xlu0 %49
    %vm51 = vcmask 589312
    %52 = vst.msk [vmem:[#allocation0] sm:$0x1] %vm51, %v50
    %s53 = scalar_lea.vmem %s0, 7
    %v54 = vld [vmem:[%s53] sm:$0x1]
    %55 = vrot.lane.b32.xlu0 %v54, 56
    %v56 = vpop.permute.xlu0 %55
    %vm57 = vcmask 523712
    %58 = vst.msk [vmem:[#allocation0] sm:$0x1] %vm57, %v56
    %s59 = scalar_lea.vmem %s0, 6
    %v60 = vld [vmem:[%s59] sm:$0x1]
    %61 = vrot.lane.b32.xlu0 %v60, 48
    %v62 = vpop.permute.xlu0 %61
    %vm63 = vcmask 458112
    %64 = vst.msk [vmem:[#allocation0] sm:$0x1] %vm63, %v62
    %s65 = scalar_lea.vmem %s0, 5
    %v66 = vld [vmem:[%s65] sm:$0x1]
    %67 = vrot.lane.b32.xlu0 %v66, 40
    %v68 = vpop.permute.xlu0 %67
    %vm69 = vcmask 392512
    %70 = vst.msk [vmem:[#allocation0] sm:$0x1] %vm69, %v68
    %s71 = scalar_lea.vmem %s0, 4
    %v72 = vld [vmem:[%s71] sm:$0x1]
    %73 = vrot.lane.b32.xlu0 %v72, 32
    %v74 = vpop.permute.xlu0 %73
    %vm75 = vcmask 326912
    %76 = vst.msk [vmem:[#allocation0] sm:$0x1] %vm75, %v74
    %s77 = scalar_lea.vmem %s0, 3
    %v78 = vld [vmem:[%s77] sm:$0x1]
    %79 = vrot.lane.b32.xlu0 %v78, 24
    %v80 = vpop.permute.xlu0 %79
    %vm81 = vcmask 261312
    %82 = vst.msk [vmem:[#allocation0] sm:$0x1] %vm81, %v80
    %s83 = scalar_lea.vmem %s0, 2
    %v84 = vld [vmem:[%s83] sm:$0x1]
    %85 = vrot.lane.b32.xlu0 %v84, 16
    %v86 = vpop.permute.xlu0 %85
    %vm87 = vcmask 195712
    %88 = vst.msk [vmem:[#allocation0] sm:$0x1] %vm87, %v86
    %s89 = scalar_lea.vmem %s0, 1
    %v90 = vld [vmem:[%s89] sm:$0x1]
    %91 = vrot.lane.b32.xlu0 %v90, 8
    %v92 = vpop.permute.xlu0 %91
    %vm93 = vcmask 130112
    %94 = vst.msk [vmem:[#allocation0] sm:$0x1] %vm93, %v92
    %s96 = sshllo.u32 0, 1
    %v98 = vld [vmem:[#allocation0] sm:%s96]
    %s99 = sshllo.u32 0, 1
    %100 = vst [vmem:[%s1] sm:%s99] %v98

// kernel: bidirectional_conv3d.1
$region0: #{bidirectional_conv3d.1}
  #allocation0 [shape = 'u32[]', space=smem, size = 0x4, offset = 0x4, fixed_abs, tag = 'smem constant byte address 0x4 - core index']
  #allocation1 [shape = 'u32[144,128]{1,0:T(1,128)}', space=vmem, size = 0x12000, scoped, tag = 'internal scratch']
  %s0 = inlined_call_operand.vmem [shape: bf16[2,18,16,192], index: 0, kind: input, shape index: {}]
  %s1 = inlined_call_operand.vmem [shape: bf16[3,192,128], index: 1, kind: input, shape index: {}]
  %s2 = inlined_call_operand.vmem [shape: f32[1,128], index: 2, kind: input, shape index: {}]
  %s3 = inlined_call_operand.vmem [shape: f32[2,256,128], index: 3, kind: output, shape index: {}]
  %s4 = sld [smem:[#allocation0]]
  $region45: #{bidirectional_conv3d.1} parent=0
    _
  %s6 = ssub.s32 1, %s4
  %s7 = scalar_select 0, %s6, %s4
  loop: start=0, step=1, limit=4
  $region2: #{bidirectional_conv3d.1} parent=0 // loop_pre_header
    _
  $region3: #{bidirectional_conv3d.1} parent=0 // loop_header
    %s9 = sphi 0, %s13
    %p10 = scmp.ge.s32.totalorder %s9, 4
    %s16 = sphi 0, %s28
    %s17 = sphi 0, %s24
    %s18 = sphi 0, %s16
    %s19 = sphi 0, %s17
    %s20 = sphi 0, %s18
    %s21 = sphi 0, %s19
    %s31 = sphi 0, %s33
    %s34 = sphi 0, %s31
    %s35 = sphi 0, %s34
    %s51 = sphi 0, %s35
    %s55 = sphi 0, %s55
    %s57 = sphi 0, %s55
    %s58 = sphi 0, %s57
    %s72 = sphi 0, %s58
    %s76 = sphi 0, %s76
    %s78 = sphi 0, %s76
    %s79 = sphi 0, %s78
    %s93 = sphi 0, %s79
    %s101 = sphi 0, %s103
    %s104 = sphi 0, %s101
    %s105 = sphi 0, %s104
    %s121 = sphi 0, %s105
  $region4: #{bidirectional_conv3d.1} parent=0 // loop_header_branch
    %12 = sbr.rel (%p10) target = $region8
  $region5: #{bidirectional_conv3d.1} parent=0 // loop_body
    %s14 = ssub.s32 %s9, 1
    %s15 = ssub.s32 %s9, 2
    %s22 = sadd.s32 1, %s17
    %p23 = scmp.ge.s32.totalorder %s22, 1
    %s24 = scalar_select %p23, 0, %s22
    %s25 = sadd.s32 1, %s16
    %s26 = scalar_select %p23, %s25, %s16
    %p27 = scmp.ge.s32.totalorder %s26, 2
    %s28 = scalar_select %p27, 0, %s26
    %s29 = ssub.s32 %s16, %s28
    %p30 = scmp.eq.s32.totalorder %s29, 0
    %s32 = sadd.s32 %s31, 1
    %s33 = scalar_select %p30, %s31, %s32
    %p36 = pneg %p30
    %p37 = scmp.eq.s32.totalorder %s9, 1
    %p38 = por %p36, %p37
    %p39 = scmp.ne.s32.totalorder %s31, %s34
    %p40 = scmp.eq.s32.totalorder %s9, 0
    %p41 = por %p39, %p40
    %p42 = scmp.ne.s32.totalorder %s31, %s34
    %p43 = scmp.eq.s32.totalorder %s14, 1
    %p44 = por %p42, %p43
    %p45 = scmp.ne.s32.totalorder %s34, %s35
    %p46 = scmp.eq.s32.totalorder %s14, 0
    %p47 = por %p45, %p46
    %p48 = scmp.ne.s32.totalorder %s34, %s35
    %p49 = scmp.eq.s32.totalorder %s15, 1
    %p50 = por %p48, %p49
    %p52 = scmp.ne.s32.totalorder %s35, %s51
    %p53 = scmp.eq.s32.totalorder %s15, 0
    %p54 = por %p52, %p53
    %s56 = sadd.s32 %s55, 1
    %p59 = scmp.eq.s32.totalorder %s9, 1
    %p60 = scmp.ne.s32.totalorder %s55, %s57
    %p61 = scmp.eq.s32.totalorder %s9, 0
    %p62 = por %p60, %p61
    %p63 = scmp.ne.s32.totalorder %s55, %s57
    %p64 = scmp.eq.s32.totalorder %s14, 1
    %p65 = por %p63, %p64
    %p66 = scmp.ne.s32.totalorder %s57, %s58
    %p67 = scmp.eq.s32.totalorder %s14, 0
    %p68 = por %p66, %p67
    %p69 = scmp.ne.s32.totalorder %s57, %s58
    %p70 = scmp.eq.s32.totalorder %s15, 1
    %p71 = por %p69, %p70
    %p73 = scmp.ne.s32.totalorder %s58, %s72
    %p74 = scmp.eq.s32.totalorder %s15, 0
    %p75 = por %p73, %p74
    %s77 = sadd.s32 %s76, 1
    %p80 = scmp.eq.s32.totalorder %s9, 1
    %p81 = scmp.ne.s32.totalorder %s76, %s78
    %p82 = scmp.eq.s32.totalorder %s9, 0
    %p83 = por %p81, %p82
    %p84 = scmp.ne.s32.totalorder %s76, %s78
    %p85 = scmp.eq.s32.totalorder %s14, 1
    %p86 = por %p84, %p85
    %p87 = scmp.ne.s32.totalorder %s78, %s79
    %p88 = scmp.eq.s32.totalorder %s14, 0
    %p89 = por %p87, %p88
    %p90 = scmp.ne.s32.totalorder %s78, %s79
    %p91 = scmp.eq.s32.totalorder %s15, 1
    %p92 = por %p90, %p91
    %p94 = scmp.ne.s32.totalorder %s79, %s93
    %p95 = scmp.eq.s32.totalorder %s15, 0
    %p96 = por %p94, %p95
    %s97 = ssub.s32 %s16, %s28
    %s98 = ssub.s32 %s17, %s24
    %s99 = sor.u32 %s97, %s98
    %p100 = scmp.eq.s32.totalorder %s99, 0
    %s102 = sadd.s32 %s101, 1
    %s103 = scalar_select %p100, %s101, %s102
    %p106 = pneg %p100
    %p107 = scmp.eq.s32.totalorder %s9, 1
    %p108 = por %p106, %p107
    %p109 = scmp.ne.s32.totalorder %s101, %s104
    %p110 = scmp.eq.s32.totalorder %s9, 0
    %p111 = por %p109, %p110
    %p112 = scmp.ne.s32.totalorder %s101, %s104
    %p113 = scmp.eq.s32.totalorder %s14, 1
    %p114 = por %p112, %p113
    %p115 = scmp.ne.s32.totalorder %s104, %s105
    %p116 = scmp.eq.s32.totalorder %s14, 0
    %p117 = por %p115, %p116
    %p118 = scmp.ne.s32.totalorder %s104, %s105
    %p119 = scmp.eq.s32.totalorder %s15, 1
    %p120 = por %p118, %p119
    %p122 = scmp.ne.s32.totalorder %s105, %s121
    %p123 = scmp.eq.s32.totalorder %s15, 0
    %p124 = por %p122, %p123
    %p125 = scmp.le.s32.totalorder 1, %s9
    %p126 = scmp.lt.s32.totalorder %s9, 3
    %p127 = pnand %p125, %p126
    %p128 = pneg %p127
    // Predicated region
    $region9: #{bidirectional_conv3d.1} parent=5 // pred_check
      _
    $region10: #{bidirectional_conv3d.1} parent=5 // pred_check_branch
      %130 = sbr.rel (%p127) target = $region12
    $region11: #{bidirectional_conv3d.1} parent=5 // pred_region
      %s131 = ssub.s32 %s9, 1
      // Predicated region
      $region13: #{bidirectional_conv3d.1} parent=11 // pred_check
        %p132 = pneg %p68
      $region14: #{bidirectional_conv3d.1} parent=11 // pred_check_branch
        %134 = sbr.rel (%p132) target = $region16
      $region15: #{bidirectional_conv3d.1} parent=11 // pred_region
        _
      $region16: #{bidirectional_conv3d.1} parent=11 // pred_fallthru
        _
      // Predicated region
      $region17: #{bidirectional_conv3d.1} parent=11 // pred_check
        %p135 = pneg %p89
      $region18: #{bidirectional_conv3d.1} parent=11 // pred_check_branch
        %137 = sbr.rel (%p135) target = $region20
      $region19: #{bidirectional_conv3d.1} parent=11 // pred_region
        _
      $region20: #{bidirectional_conv3d.1} parent=11 // pred_fallthru
        _
    $region12: #{bidirectional_conv3d.1} parent=5 // pred_fallthru
      _
    %p138 = scmp.lt.s32.totalorder %s9, 2
    // Predicated region
    $region21: #{bidirectional_conv3d.1} parent=5 // pred_check
      %p139 = pneg %p138
    $region22: #{bidirectional_conv3d.1} parent=5 // pred_check_branch
      %141 = sbr.rel (%p139) target = $region24
    $region23: #{bidirectional_conv3d.1} parent=5 // pred_region
      // Predicated region
      $region25: #{bidirectional_conv3d.1} parent=23 // pred_check
        %p142 = pneg %p41
      $region26: #{bidirectional_conv3d.1} parent=23 // pred_check_branch
        %144 = sbr.rel (%p142) target = $region28
      $region27: #{bidirectional_conv3d.1} parent=23 // pred_region
        %p145 = scmp.lt.s32.totalorder %s16, 1
        %s146 = scalar_select %p145, %s16, 1
        %s147 = smul.addr %s146, 72
        %s148 = smul.addr %s147, 4
        %s149 = scalar_lea.vmem %s0, %s148
      $region28: #{bidirectional_conv3d.1} parent=23 // pred_fallthru
        _
    $region24: #{bidirectional_conv3d.1} parent=5 // pred_fallthru
      _
    %p150 = scmp.le.s32.totalorder 1, %s9
    %p151 = scmp.lt.s32.totalorder %s9, 3
    %p152 = pnand %p150, %p151
    %p153 = pneg %p152
    // Predicated region
    $region29: #{bidirectional_conv3d.1} parent=5 // pred_check
      _
    $region30: #{bidirectional_conv3d.1} parent=5 // pred_check_branch
      %155 = sbr.rel (%p152) target = $region32
    $region31: #{bidirectional_conv3d.1} parent=5 // pred_region
      %s156 = ssub.s32 %s9, 1
      %p157 = scmp.lt.s32.totalorder %s18, 1
      %s158 = scalar_select %p157, %s18, 1
      %s159 = smul.addr %s158, 72
      %s160 = smul.addr %s159, 4
      %s161 = scalar_lea.vmem %s0, %s160
      %p162 = pneg %p47
      %p163 = pneg %p44
      %p164 = pneg %p68
      %p165 = pneg %p65
      %p166 = pneg %p89
      %p167 = pneg %p86
      %p168 = pneg %p117
      %p169 = pneg %p114
      %s170 = smul.u32 32, %s19
      %p171 = scmp.lt.s32.totalorder %s18, 1
      %s172 = scalar_select %p171, %s18, 1
      %p173 = scmp.lt.s32.totalorder %s170, 31
      %s174 = scalar_select %p173, %s170, 31
      %s175 = smul.addr %s172, 32
      %s176 = sadd.s32 %s174, %s175
      %s177 = smul.addr %s176, 8
      %s178 = scalar_lea.vmem %s3, %s177
      %p179 = scmp.lt.s32.totalorder %s18, 1
      %s180 = scalar_select %p179, %s18, 1
      %s181 = smul.addr %s180, 72
      %s182 = smul.addr %s181, 4
      %s183 = scalar_lea.vmem %s0, %s182
      %s184 = smul.u32 32, %s19
      %p185 = scmp.lt.s32.totalorder %s18, 1
      %s186 = scalar_select %p185, %s18, 1
      %p187 = scmp.lt.s32.totalorder %s184, 31
      %s188 = scalar_select %p187, %s184, 31
      %s189 = smul.addr %s186, 32
      %s190 = sadd.s32 %s188, %s189
      %s191 = smul.addr %s190, 8
      %s192 = scalar_lea.vmem %s3, %s191
      %s193 = smul.u32 32, %s19
      %v195 = vld [vmem:[%s2] sm:$0x1]
      %s196 = smul.u32 %s19, 16
      %s197 = smul.u32 %s196, 4
      %s198 = smul.addr %s197, 4
      %s199 = scalar_lea.vmem %s183, %s198
      %v200 = vld [vmem:[%s199] sm:$0xff]
      %v201 = vld [vmem:[%s199 + $0x8] sm:$0xff]
      %v202 = vld [vmem:[%s199 + $0x10] sm:$0xff]
      %v203 = vld [vmem:[%s199 + $0x18] sm:$0xff]
      %v204 = vld [vmem:[%s199 + $0x20] sm:$0xff]
      %v205 = vld [vmem:[%s199 + $0x28] sm:$0xff]
      %v206 = vld [vmem:[%s199 + $0x30] sm:$0xff]
      %v207 = vld [vmem:[%s199 + $0x38] sm:$0xff]
      %v208 = vld [vmem:[%s199 + $0x40] sm:$0xff]
      %v209 = vld [vmem:[%s199 + $0x48] sm:$0xff]
      %v210 = vld [vmem:[%s199 + $0x50] sm:$0xff]
      %v211 = vld [vmem:[%s199 + $0x58] sm:$0xff]
      %v212 = vld [vmem:[%s199 + $0x60] sm:$0xff]
      %v213 = vld [vmem:[%s199 + $0x68] sm:$0xff]
      %v214 = vld [vmem:[%s199 + $0x70] sm:$0xff]
      %v215 = vld [vmem:[%s199 + $0x78] sm:$0xff]
      %v216 = vld [vmem:[%s199 + $0x80] sm:$0xff]
      %v217 = vld [vmem:[%s199 + $0x88] sm:$0xff]
      %v218 = vld [vmem:[%s199 + $0x90] sm:$0xff]
      %v219 = vld [vmem:[%s199 + $0x98] sm:$0xff]
      %v220 = vld [vmem:[%s199 + $0xa0] sm:$0xff]
      %v221 = vld [vmem:[%s199 + $0xa8] sm:$0xff]
      %v222 = vld [vmem:[%s199 + $0xb0] sm:$0xff]
      %v223 = vld [vmem:[%s199 + $0xb8] sm:$0xff]
      %v224 = vld [vmem:[%s199 + $0xc0] sm:$0xff]
      %v225 = vld [vmem:[%s199 + $0xc8] sm:$0xff]
      %v226 = vld [vmem:[%s199 + $0xd0] sm:$0xff]
      %v227 = vld [vmem:[%s199 + $0xd8] sm:$0xff]
      %v228 = vld [vmem:[%s199 + $0xe0] sm:$0xff]
      %v229 = vld [vmem:[%s199 + $0xe8] sm:$0xff]
      %v230 = vld [vmem:[%s199 + $0xf0] sm:$0xff]
      %v231 = vld [vmem:[%s199 + $0xf8] sm:$0xff]
      %v232 = vld [vmem:[%s1] sm:$0xf]
      %v233 = vld [vmem:[%s1 + $0x4] sm:$0xf]
      %v234 = vld [vmem:[%s1 + $0x8] sm:$0xf]
      %v235 = vld [vmem:[%s1 + $0xc] sm:$0xf]
      %v236 = vld [vmem:[%s1 + $0x10] sm:$0xf]
      %v237 = vld [vmem:[%s1 + $0x14] sm:$0xf]
      %v238 = vld [vmem:[%s1 + $0x18] sm:$0xf]
      %v239 = vld [vmem:[%s1 + $0x1c] sm:$0xf]
      %v240 = vld [vmem:[%s1 + $0x20] sm:$0xf]
      %v241 = vld [vmem:[%s1 + $0x24] sm:$0xf]
      %v242 = vld [vmem:[%s1 + $0x28] sm:$0xf]
      %v243 = vld [vmem:[%s1 + $0x2c] sm:$0xf]
      %v244 = vld [vmem:[%s1 + $0x30] sm:$0xf]
      %v245 = vld [vmem:[%s1 + $0x34] sm:$0xf]
      %v246 = vld [vmem:[%s1 + $0x38] sm:$0xf]
      %v247 = vld [vmem:[%s1 + $0x3c] sm:$0xf]
      %v248 = vld [vmem:[%s1 + $0x40] sm:$0xf]
      %v249 = vld [vmem:[%s1 + $0x44] sm:$0xf]
      %v250 = vld [vmem:[%s1 + $0x48] sm:$0xf]
      %v251 = vld [vmem:[%s1 + $0x4c] sm:$0xf]
      %v252 = vld [vmem:[%s1 + $0x50] sm:$0xf]
      %v253 = vld [vmem:[%s1 + $0x54] sm:$0xf]
      %v254 = vld [vmem:[%s1 + $0x58] sm:$0xf]
      %v255 = vld [vmem:[%s1 + $0x5c] sm:$0xf]
      %v288 = vunpack.c.l.b16 %v200
      %v289 = vunpack.c.h.b16 %v200
      %v290 = vunpack.c.l.b16 %v201
      %v291 = vunpack.c.h.b16 %v201
      %v292 = vunpack.c.l.b16 %v202
      %v293 = vunpack.c.h.b16 %v202
      %v294 = vunpack.c.l.b16 %v203
      %v295 = vunpack.c.h.b16 %v203
      %v296 = vunpack.c.l.b16 %v204
      %v297 = vunpack.c.h.b16 %v204
      %v298 = vunpack.c.l.b16 %v205
      %v299 = vunpack.c.h.b16 %v205
      %v300 = vunpack.c.l.b16 %v206
      %v301 = vunpack.c.h.b16 %v206
      %v302 = vunpack.c.l.b16 %v207
      %v303 = vunpack.c.h.b16 %v207
      %v304 = vunpack.c.l.b16 %v208
      %v305 = vunpack.c.h.b16 %v208
      %v306 = vunpack.c.l.b16 %v209
      %v307 = vunpack.c.h.b16 %v209
      %v308 = vunpack.c.l.b16 %v210
      %v309 = vunpack.c.h.b16 %v210
      %v310 = vunpack.c.l.b16 %v211
      %v311 = vunpack.c.h.b16 %v211
      %v312 = vunpack.c.l.b16 %v212
      %v313 = vunpack.c.h.b16 %v212
      %v314 = vunpack.c.l.b16 %v213
      %v315 = vunpack.c.h.b16 %v213
      %v316 = vunpack.c.l.b16 %v214
      %v317 = vunpack.c.h.b16 %v214
      %v318 = vunpack.c.l.b16 %v215
      %v319 = vunpack.c.h.b16 %v215
      %v320 = vunpack.c.l.b16 %v216
      %v321 = vunpack.c.h.b16 %v216
      %v322 = vunpack.c.l.b16 %v217
      %v323 = vunpack.c.h.b16 %v217
      %v324 = vunpack.c.l.b16 %v218
      %v325 = vunpack.c.h.b16 %v218
      %v326 = vunpack.c.l.b16 %v219
      %v327 = vunpack.c.h.b16 %v219
      %v328 = vunpack.c.l.b16 %v220
      %v329 = vunpack.c.h.b16 %v220
      %v330 = vunpack.c.l.b16 %v221
      %v331 = vunpack.c.h.b16 %v221
      %v332 = vunpack.c.l.b16 %v222
      %v333 = vunpack.c.h.b16 %v222
      %v334 = vunpack.c.l.b16 %v223
      %v335 = vunpack.c.h.b16 %v223
      %v336 = vunpack.c.l.b16 %v224
      %v337 = vunpack.c.h.b16 %v224
      %v338 = vunpack.c.l.b16 %v225
      %v339 = vunpack.c.h.b16 %v225
      %v340 = vunpack.c.l.b16 %v226
      %v341 = vunpack.c.h.b16 %v226
      %v342 = vunpack.c.l.b16 %v227
      %v343 = vunpack.c.h.b16 %v227
      %v344 = vunpack.c.l.b16 %v228
      %v345 = vunpack.c.h.b16 %v228
      %v346 = vunpack.c.l.b16 %v229
      %v347 = vunpack.c.h.b16 %v229
      %v348 = vunpack.c.l.b16 %v230
      %v349 = vunpack.c.h.b16 %v230
      %v350 = vunpack.c.l.b16 %v231
      %v351 = vunpack.c.h.b16 %v231
      %v352 = vpack.c.b16 %v290, %v288
      %v353 = vpack.c.b16 %v291, %v289
      %v354 = vpack.c.b16 %v294, %v292
      %v355 = vpack.c.b16 %v295, %v293
      %v356 = vpack.c.b16 %v298, %v296
      %v357 = vpack.c.b16 %v299, %v297
      %v358 = vpack.c.b16 %v302, %v300
      %v359 = vpack.c.b16 %v303, %v301
      %v360 = vpack.c.b16 %v306, %v304
      %v361 = vpack.c.b16 %v307, %v305
      %v362 = vpack.c.b16 %v310, %v308
      %v363 = vpack.c.b16 %v311, %v309
      %v364 = vpack.c.b16 %v314, %v312
      %v365 = vpack.c.b16 %v315, %v313
      %v366 = vpack.c.b16 %v318, %v316
      %v367 = vpack.c.b16 %v319, %v317
      %v368 = vpack.c.b16 %v322, %v320
      %v369 = vpack.c.b16 %v323, %v321
      %v370 = vpack.c.b16 %v326, %v324
      %v371 = vpack.c.b16 %v327, %v325
      %v372 = vpack.c.b16 %v330, %v328
      %v373 = vpack.c.b16 %v331, %v329
      %v374 = vpack.c.b16 %v334, %v332
      %v375 = vpack.c.b16 %v335, %v333
      %v376 = vpack.c.b16 %v338, %v336
      %v377 = vpack.c.b16 %v339, %v337
      %v378 = vpack.c.b16 %v342, %v340
      %v379 = vpack.c.b16 %v343, %v341
      %v380 = vpack.c.b16 %v346, %v344
      %v381 = vpack.c.b16 %v347, %v345
      %v382 = vpack.c.b16 %v350, %v348
      %v383 = vpack.c.b16 %v351, %v349
      %v424 = vunpack.c.l.b16 %v232
      %v425 = vunpack.c.l.b16 %v233
      %v426 = vunpack.c.l.b16 %v234
      %v427 = vunpack.c.l.b16 %v235
      %v428 = vunpack.c.l.b16 %v236
      %v429 = vunpack.c.l.b16 %v237
      %v430 = vunpack.c.l.b16 %v238
      %v431 = vunpack.c.l.b16 %v239
      %v432 = vunpack.c.l.b16 %v240
      %v433 = vunpack.c.l.b16 %v241
      %v434 = vunpack.c.l.b16 %v242
      %v435 = vunpack.c.l.b16 %v243
      %v436 = vunpack.c.l.b16 %v244
      %v437 = vunpack.c.l.b16 %v245
      %v438 = vunpack.c.l.b16 %v246
      %v439 = vunpack.c.l.b16 %v247
      %v440 = vunpack.c.l.b16 %v248
      %v441 = vunpack.c.l.b16 %v249
      %v442 = vunpack.c.l.b16 %v250
      %v443 = vunpack.c.l.b16 %v251
      %v444 = vunpack.c.l.b16 %v252
      %v445 = vunpack.c.l.b16 %v253
      %v446 = vunpack.c.l.b16 %v254
      %v447 = vunpack.c.l.b16 %v255
      %v448 = vpack.c.b16 %v425, %v424
      %v449 = vpack.c.b16 %v427, %v426
      %v450 = vpack.c.b16 %v429, %v428
      %v451 = vpack.c.b16 %v431, %v430
      %v452 = vpack.c.b16 %v433, %v432
      %v453 = vpack.c.b16 %v435, %v434
      %v454 = vpack.c.b16 %v437, %v436
      %v455 = vpack.c.b16 %v439, %v438
      %v456 = vpack.c.b16 %v441, %v440
      %v457 = vpack.c.b16 %v443, %v442
      %v458 = vpack.c.b16 %v445, %v444
      %v459 = vpack.c.b16 %v447, %v446
      %vm472 = vcmask 523264
      %v474 = vsel %vm472, %v353, 0
      %v477 = vsel %vm472, %v355, 0
      %v480 = vsel %vm472, %v357, 0
      %v483 = vsel %vm472, %v359, 0
      %v486 = vsel %vm472, %v361, 0
      %v489 = vsel %vm472, %v363, 0
      %v492 = vsel %vm472, %v365, 0
      %v495 = vsel %vm472, %v367, 0
      %v498 = vsel %vm472, %v369, 0
      %v501 = vsel %vm472, %v371, 0
      %v504 = vsel %vm472, %v373, 0
      %v507 = vsel %vm472, %v375, 0
      %v510 = vsel %vm472, %v377, 0
      %v513 = vsel %vm472, %v379, 0
      %v516 = vsel %vm472, %v381, 0
      %v519 = vsel %vm472, %v383, 0
      %521 = vmatprep.subr.bf16.mxu0 0
      %522 = vmatpush1.bf16.msra.mxu0 %v448
      %523 = vmatprep.subr.bf16.mxu0 0
      %524 = vmatpush1.bf16.msra.mxu0 %v449
      %525 = vmatprep.subr.bf16.mxu0 0
      %526 = vmatpush1.bf16.msra.mxu0 %v450
      %527 = vmatprep.subr.bf16.mxu0 0
      %528 = vmatpush1.bf16.msra.mxu0 %v451
      %529 = vmatprep.subr.bf16.mxu0 0
      %530 = vmatpush1.bf16.msra.mxu0 %v452
      %531 = vmatprep.subr.bf16.mxu0 0
      %532 = vmatpush1.bf16.msra.mxu0 %v453
      %533 = vmatprep.subr.bf16.mxu0 0
      %534 = vmatpush1.bf16.msra.mxu0 %v454
      %535 = vmatprep.subr.bf16.mxu0 0
      %536 = vmatpush1.bf16.msra.mxu0 %v455
      %537 = vmatprep.subr.bf16.mxu0 0
      %538 = vmatpush1.bf16.msra.mxu0 %v456
      %539 = vmatprep.subr.bf16.mxu0 0
      %540 = vmatpush1.bf16.msra.mxu0 %v457
      %541 = vmatprep.subr.bf16.mxu0 0
      %542 = vmatpush1.bf16.msra.mxu0 %v458
      %543 = vmatprep.subr.bf16.mxu0 0
      %544 = vmatpush1.bf16.msra.mxu0 %v459
      %545 = vmatprep.subr.bf16.mxu0 0
      %546 = vmatpush1.bf16.msra.mxu0 0
      %547 = vmatprep.subr.bf16.mxu0 0
      %548 = vmatpush1.bf16.msra.mxu0 0
      %549 = vmatprep.subr.bf16.mxu0 0
      %550 = vmatpush1.bf16.msra.mxu0 0
      %551 = vmatprep.subr.bf16.mxu0 0
      %552 = vmatpush1.bf16.msra.mxu0 0
      %553 = vmatprep.mubr.bf16.mxu0 %v474
      %554 = vmatmul.mubr.bf16.gmra.mrb[0].mxu0 %v352
      %v555 = vpop.f32.mrb[0].mxu0
      %v556 = vadd.f32 0.0, %v555
      %v557 = vpop.f32.mrb[0].mxu0
      %v558 = vpop.f32.mrb[0].mxu0
      %v559 = vadd.f32 0.0, %v558
      %v560 = vpop.f32.mrb[0].mxu0
      %561 = vmatprep.mubr.bf16.mxu0 %v477
      %562 = vmatmul.mubr.bf16.gmra.mrb[0].mxu0 %v354
      %v563 = vpop.f32.mrb[0].mxu0
      %v564 = vadd.f32 0.0, %v563
      %v565 = vpop.f32.mrb[0].mxu0
      %v566 = vpop.f32.mrb[0].mxu0
      %v567 = vadd.f32 0.0, %v566
      %v568 = vpop.f32.mrb[0].mxu0
      %569 = vmatprep.mubr.bf16.mxu0 %v480
      %570 = vmatmul.mubr.bf16.gmra.mrb[0].mxu0 %v356
      %v571 = vpop.f32.mrb[0].mxu0
      %v572 = vadd.f32 0.0, %v571
      %v573 = vpop.f32.mrb[0].mxu0
      %v574 = vpop.f32.mrb[0].mxu0
      %v575 = vadd.f32 0.0, %v574
      %v576 = vpop.f32.mrb[0].mxu0
      %577 = vmatprep.mubr.bf16.mxu0 %v483
      %578 = vmatmul.mubr.bf16.gmra.mrb[0].mxu0 %v358
      %v579 = vpop.f32.mrb[0].mxu0
      %v580 = vadd.f32 0.0, %v579
      %v581 = vpop.f32.mrb[0].mxu0
      %v582 = vpop.f32.mrb[0].mxu0
      %v583 = vadd.f32 0.0, %v582
      %v584 = vpop.f32.mrb[0].mxu0
      %585 = vmatprep.mubr.bf16.mxu0 %v486
      %586 = vmatmul.mubr.bf16.gmra.mrb[0].mxu0 %v360
      %v587 = vpop.f32.mrb[0].mxu0
      %v588 = vadd.f32 0.0, %v587
      %v589 = vpop.f32.mrb[0].mxu0
      %v590 = vpop.f32.mrb[0].mxu0
      %v591 = vadd.f32 0.0, %v590
      %v592 = vpop.f32.mrb[0].mxu0
      %593 = vmatprep.mubr.bf16.mxu0 %v489
      %594 = vmatmul.mubr.bf16.gmra.mrb[0].mxu0 %v362
      %v595 = vpop.f32.mrb[0].mxu0
      %v596 = vadd.f32 0.0, %v595
      %v597 = vpop.f32.mrb[0].mxu0
      %v598 = vpop.f32.mrb[0].mxu0
      %v599 = vadd.f32 0.0, %v598
      %v600 = vpop.f32.mrb[0].mxu0
      %601 = vmatprep.mubr.bf16.mxu0 %v492
      %602 = vmatmul.mubr.bf16.gmra.mrb[0].mxu0 %v364
      %v603 = vpop.f32.mrb[0].mxu0
      %v604 = vadd.f32 0.0, %v603
      %v605 = vpop.f32.mrb[0].mxu0
      %v606 = vpop.f32.mrb[0].mxu0
      %v607 = vadd.f32 0.0, %v606
      %v608 = vpop.f32.mrb[0].mxu0
      %609 = vmatprep.mubr.bf16.mxu0 %v495
      %610 = vmatmul.mubr.bf16.gmra.mrb[0].mxu0 %v366
      %v611 = vpop.f32.mrb[0].mxu0
      %v612 = vadd.f32 0.0, %v611
      %v613 = vpop.f32.mrb[0].mxu0
      %v614 = vpop.f32.mrb[0].mxu0
      %v615 = vadd.f32 0.0, %v614
      %v616 = vpop.f32.mrb[0].mxu0
      %617 = vmatprep.mubr.bf16.mxu0 %v498
      %618 = vmatmul.mubr.bf16.gmra.mrb[0].mxu0 %v368
      %v619 = vpop.f32.mrb[0].mxu0
      %v620 = vadd.f32 0.0, %v619
      %v621 = vpop.f32.mrb[0].mxu0
      %v622 = vpop.f32.mrb[0].mxu0
      %v623 = vadd.f32 0.0, %v622
      %v624 = vpop.f32.mrb[0].mxu0
      %625 = vmatprep.mubr.bf16.mxu0 %v501
      %626 = vmatmul.mubr.bf16.gmra.mrb[0].mxu0 %v370
      %v627 = vpop.f32.mrb[0].mxu0
      %v628 = vadd.f32 0.0, %v627
      %v629 = vpop.f32.mrb[0].mxu0
      %v630 = vpop.f32.mrb[0].mxu0
      %v631 = vadd.f32 0.0, %v630
      %v632 = vpop.f32.mrb[0].mxu0
      %633 = vmatprep.mubr.bf16.mxu0 %v504
      %634 = vmatmul.mubr.bf16.gmra.mrb[0].mxu0 %v372
      %v635 = vpop.f32.mrb[0].mxu0
      %v636 = vadd.f32 0.0, %v635
      %v637 = vpop.f32.mrb[0].mxu0
      %v638 = vpop.f32.mrb[0].mxu0
      %v639 = vadd.f32 0.0, %v638
      %v640 = vpop.f32.mrb[0].mxu0
      %641 = vmatprep.mubr.bf16.mxu0 %v507
      %642 = vmatmul.mubr.bf16.gmra.mrb[0].mxu0 %v374
      %v643 = vpop.f32.mrb[0].mxu0
      %v644 = vadd.f32 0.0, %v643
      %v645 = vpop.f32.mrb[0].mxu0
      %v646 = vpop.f32.mrb[0].mxu0
      %v647 = vadd.f32 0.0, %v646
      %v648 = vpop.f32.mrb[0].mxu0
      %649 = vmatprep.mubr.bf16.mxu0 %v510
      %650 = vmatmul.mubr.bf16.gmra.mrb[0].mxu0 %v376
      %v651 = vpop.f32.mrb[0].mxu0
      %v652 = vadd.f32 0.0, %v651
      %v653 = vpop.f32.mrb[0].mxu0
      %v654 = vpop.f32.mrb[0].mxu0
      %v655 = vadd.f32 0.0, %v654
      %v656 = vpop.f32.mrb[0].mxu0
      %657 = vmatprep.mubr.bf16.mxu0 %v513
      %658 = vmatmul.mubr.bf16.gmra.mrb[0].mxu0 %v378
      %v659 = vpop.f32.mrb[0].mxu0
      %v660 = vadd.f32 0.0, %v659
      %v661 = vpop.f32.mrb[0].mxu0
      %v662 = vpop.f32.mrb[0].mxu0
      %v663 = vadd.f32 0.0, %v662
      %v664 = vpop.f32.mrb[0].mxu0
      %665 = vmatprep.mubr.bf16.mxu0 %v516
      %666 = vmatmul.mubr.bf16.gmra.mrb[0].mxu0 %v380
      %v667 = vpop.f32.mrb[0].mxu0
      %v668 = vadd.f32 0.0, %v667
      %v669 = vpop.f32.mrb[0].mxu0
      %v670 = vpop.f32.mrb[0].mxu0
      %v671 = vadd.f32 0.0, %v670
      %v672 = vpop.f32.mrb[0].mxu0
      %673 = vmatprep.mubr.bf16.mxu0 %v519
      %674 = vmatmul.mubr.bf16.gmra.mrb[0].mxu0 %v382
      %v675 = vpop.f32.mrb[0].mxu0
      %v676 = vadd.f32 0.0, %v675
      %v677 = vpop.f32.mrb[0].mxu0
      %v678 = vpop.f32.mrb[0].mxu0
      %v679 = vadd.f32 0.0, %v678
      %v680 = vpop.f32.mrb[0].mxu0
      %681 = vdwg.mxu0
      %v683 = vlaneseq
      %v684 = vshrl.u32 %v683, 7
      %v685 = vsub.s32 0, %v684
      %v686 = vrot.slane %v195, %v685
      %v688 = vadd.f32 %v686, %v556
      %v689 = vadd.f32 %v686, %v559
      %v690 = vadd.f32 %v686, %v564
      %v691 = vadd.f32 %v686, %v567
      %v692 = vadd.f32 %v686, %v572
      %v693 = vadd.f32 %v686, %v575
      %v694 = vadd.f32 %v686, %v580
      %v695 = vadd.f32 %v686, %v583
      %v696 = vadd.f32 %v686, %v588
      %v697 = vadd.f32 %v686, %v591
      %v698 = vadd.f32 %v686, %v596
      %v699 = vadd.f32 %v686, %v599
      %v700 = vadd.f32 %v686, %v604
      %v701 = vadd.f32 %v686, %v607
      %v702 = vadd.f32 %v686, %v612
      %v703 = vadd.f32 %v686, %v615
      %v704 = vadd.f32 %v686, %v620
      %v705 = vadd.f32 %v686, %v623
      %v706 = vadd.f32 %v686, %v628
      %v707 = vadd.f32 %v686, %v631
      %v708 = vadd.f32 %v686, %v636
      %v709 = vadd.f32 %v686, %v639
      %v710 = vadd.f32 %v686, %v644
      %v711 = vadd.f32 %v686, %v647
      %v712 = vadd.f32 %v686, %v652
      %v713 = vadd.f32 %v686, %v655
      %v714 = vadd.f32 %v686, %v660
      %v715 = vadd.f32 %v686, %v663
      %v716 = vadd.f32 %v686, %v668
      %v717 = vadd.f32 %v686, %v671
      %v718 = vadd.f32 %v686, %v676
      %v719 = vadd.f32 %v686, %v679
      %s720 = sadd.s32 %s196, 1
      %s721 = smul.u32 %s720, 4
      %s722 = smul.addr %s721, 4
      %s723 = scalar_lea.vmem %s183, %s722
      %v724 = vld [vmem:[%s723] sm:$0xff]
      %v725 = vld [vmem:[%s723 + $0x8] sm:$0xff]
      %v726 = vld [vmem:[%s723 + $0x10] sm:$0xff]
      %v727 = vld [vmem:[%s723 + $0x18] sm:$0xff]
      %v728 = vld [vmem:[%s723 + $0x20] sm:$0xff]
      %v729 = vld [vmem:[%s723 + $0x28] sm:$0xff]
      %v730 = vld [vmem:[%s723 + $0x30] sm:$0xff]
      %v731 = vld [vmem:[%s723 + $0x38] sm:$0xff]
      %v732 = vld [vmem:[%s723 + $0x40] sm:$0xff]
      %v733 = vld [vmem:[%s723 + $0x48] sm:$0xff]
      %v734 = vld [vmem:[%s723 + $0x50] sm:$0xff]
      %v735 = vld [vmem:[%s723 + $0x58] sm:$0xff]
      %v736 = vld [vmem:[%s723 + $0x60] sm:$0xff]
      %v737 = vld [vmem:[%s723 + $0x68] sm:$0xff]
      %v738 = vld [vmem:[%s723 + $0x70] sm:$0xff]
      %v739 = vld [vmem:[%s723 + $0x78] sm:$0xff]
      %v740 = vld [vmem:[%s723 + $0x80] sm:$0xff]
      %v741 = vld [vmem:[%s723 + $0x88] sm:$0xff]
      %v742 = vld [vmem:[%s723 + $0x90] sm:$0xff]
      %v743 = vld [vmem:[%s723 + $0x98] sm:$0xff]
      %v744 = vld [vmem:[%s723 + $0xa0] sm:$0xff]
      %v745 = vld [vmem:[%s723 + $0xa8] sm:$0xff]
      %v746 = vld [vmem:[%s723 + $0xb0] sm:$0xff]
      %v747 = vld [vmem:[%s723 + $0xb8] sm:$0xff]
      %v748 = vld [vmem:[%s723 + $0xc0] sm:$0xff]
      %v749 = vld [vmem:[%s723 + $0xc8] sm:$0xff]
      %v750 = vld [vmem:[%s723 + $0xd0] sm:$0xff]
      %v751 = vld [vmem:[%s723 + $0xd8] sm:$0xff]
      %v752 = vld [vmem:[%s723 + $0xe0] sm:$0xff]
      %v753 = vld [vmem:[%s723 + $0xe8] sm:$0xff]
      %v754 = vld [vmem:[%s723 + $0xf0] sm:$0xff]
      %v755 = vld [vmem:[%s723 + $0xf8] sm:$0xff]
      %s756 = scalar_lea.vmem %s1, 96
      %v757 = vld [vmem:[%s756] sm:$0xf]
      %v758 = vld [vmem:[%s756 + $0x4] sm:$0xf]
      %v759 = vld [vmem:[%s756 + $0x8] sm:$0xf]
      %v760 = vld [vmem:[%s756 + $0xc] sm:$0xf]
      %v761 = vld [vmem:[%s756 + $0x10] sm:$0xf]
      %v762 = vld [vmem:[%s756 + $0x14] sm:$0xf]
      %v763 = vld [vmem:[%s756 + $0x18] sm:$0xf]
      %v764 = vld [vmem:[%s756 + $0x1c] sm:$0xf]
      %v765 = vld [vmem:[%s756 + $0x20] sm:$0xf]
      %v766 = vld [vmem:[%s756 + $0x24] sm:$0xf]
      %v767 = vld [vmem:[%s756 + $0x28] sm:$0xf]
      %v768 = vld [vmem:[%s756 + $0x2c] sm:$0xf]
      %v769 = vld [vmem:[%s756 + $0x30] sm:$0xf]
      %v770 = vld [vmem:[%s756 + $0x34] sm:$0xf]
      %v771 = vld [vmem:[%s756 + $0x38] sm:$0xf]
      %v772 = vld [vmem:[%s756 + $0x3c] sm:$0xf]
      %v773 = vld [vmem:[%s756 + $0x40] sm:$0xf]
      %v774 = vld [vmem:[%s756 + $0x44] sm:$0xf]
      %v775 = vld [vmem:[%s756 + $0x48] sm:$0xf]
      %v776 = vld [vmem:[%s756 + $0x4c] sm:$0xf]
      %v777 = vld [vmem:[%s756 + $0x50] sm:$0xf]
      %v778 = vld [vmem:[%s756 + $0x54] sm:$0xf]
      %v779 = vld [vmem:[%s756 + $0x58] sm:$0xf]
      %v780 = vld [vmem:[%s756 + $0x5c] sm:$0xf]
      %v813 = vunpack.c.l.b16 %v724
      %v814 = vunpack.c.h.b16 %v724
      %v815 = vunpack.c.l.b16 %v725
      %v816 = vunpack.c.h.b16 %v725
      %v817 = vunpack.c.l.b16 %v726
      %v818 = vunpack.c.h.b16 %v726
      %v819 = vunpack.c.l.b16 %v727
      %v820 = vunpack.c.h.b16 %v727
      %v821 = vunpack.c.l.b16 %v728
      %v822 = vunpack.c.h.b16 %v728
      %v823 = vunpack.c.l.b16 %v729
      %v824 = vunpack.c.h.b16 %v729
      %v825 = vunpack.c.l.b16 %v730
      %v826 = vunpack.c.h.b16 %v730
      %v827 = vunpack.c.l.b16 %v731
      %v828 = vunpack.c.h.b16 %v731
      %v829 = vunpack.c.l.b16 %v732
      %v830 = vunpack.c.h.b16 %v732
      %v831 = vunpack.c.l.b16 %v733
      %v832 = vunpack.c.h.b16 %v733
      %v833 = vunpack.c.l.b16 %v734
      %v834 = vunpack.c.h.b16 %v734
      %v835 = vunpack.c.l.b16 %v735
      %v836 = vunpack.c.h.b16 %v735
      %v837 = vunpack.c.l.b16 %v736
      %v838 = vunpack.c.h.b16 %v736
      %v839 = vunpack.c.l.b16 %v737
      %v840 = vunpack.c.h.b16 %v737
      %v841 = vunpack.c.l.b16 %v738
      %v842 = vunpack.c.h.b16 %v738
      %v843 = vunpack.c.l.b16 %v739
      %v844 = vunpack.c.h.b16 %v739
      %v845 = vunpack.c.l.b16 %v740
      %v846 = vunpack.c.h.b16 %v740
      %v847 = vunpack.c.l.b16 %v741
      %v848 = vunpack.c.h.b16 %v741
      %v849 = vunpack.c.l.b16 %v742
      %v850 = vunpack.c.h.b16 %v742
      %v851 = vunpack.c.l.b16 %v743
      %v852 = vunpack.c.h.b16 %v743
      %v853 = vunpack.c.l.b16 %v744
      %v854 = vunpack.c.h.b16 %v744
      %v855 = vunpack.c.l.b16 %v745
      %v856 = vunpack.c.h.b16 %v745
      %v857 = vunpack.c.l.b16 %v746
      %v858 = vunpack.c.h.b16 %v746
      %v859 = vunpack.c.l.b16 %v747
      %v860 = vunpack.c.h.b16 %v747
      %v861 = vunpack.c.l.b16 %v748
      %v862 = vunpack.c.h.b16 %v748
      %v863 = vunpack.c.l.b16 %v749
      %v864 = vunpack.c.h.b16 %v749
      %v865 = vunpack.c.l.b16 %v750
      %v866 = vunpack.c.h.b16 %v750
      %v867 = vunpack.c.l.b16 %v751
      %v868 = vunpack.c.h.b16 %v751
      %v869 = vunpack.c.l.b16 %v752
      %v870 = vunpack.c.h.b16 %v752
      %v871 = vunpack.c.l.b16 %v753
      %v872 = vunpack.c.h.b16 %v753
      %v873 = vunpack.c.l.b16 %v754
      %v874 = vunpack.c.h.b16 %v754
      %v875 = vunpack.c.l.b16 %v755
      %v876 = vunpack.c.h.b16 %v755
      %v877 = vpack.c.b16 %v815, %v813
      %v878 = vpack.c.b16 %v816, %v814
      %v879 = vpack.c.b16 %v819, %v817
      %v880 = vpack.c.b16 %v820, %v818
      %v881 = vpack.c.b16 %v823, %v821
      %v882 = vpack.c.b16 %v824, %v822
      %v883 = vpack.c.b16 %v827, %v825
      %v884 = vpack.c.b16 %v828, %v826
      %v885 = vpack.c.b16 %v831, %v829
      %v886 = vpack.c.b16 %v832, %v830
      %v887 = vpack.c.b16 %v835, %v833
      %v888 = vpack.c.b16 %v836, %v834
      %v889 = vpack.c.b16 %v839, %v837
      %v890 = vpack.c.b16 %v840, %v838
      %v891 = vpack.c.b16 %v843, %v841
      %v892 = vpack.c.b16 %v844, %v842
      %v893 = vpack.c.b16 %v847, %v845
      %v894 = vpack.c.b16 %v848, %v846
      %v895 = vpack.c.b16 %v851, %v849
      %v896 = vpack.c.b16 %v852, %v850
      %v897 = vpack.c.b16 %v855, %v853
      %v898 = vpack.c.b16 %v856, %v854
      %v899 = vpack.c.b16 %v859, %v857
      %v900 = vpack.c.b16 %v860, %v858
      %v901 = vpack.c.b16 %v863, %v861
      %v902 = vpack.c.b16 %v864, %v862
      %v903 = vpack.c.b16 %v867, %v865
      %v904 = vpack.c.b16 %v868, %v866
      %v905 = vpack.c.b16 %v871, %v869
      %v906 = vpack.c.b16 %v872, %v870
      %v907 = vpack.c.b16 %v875, %v873
      %v908 = vpack.c.b16 %v876, %v874
      %v949 = vunpack.c.l.b16 %v757
      %v950 = vunpack.c.l.b16 %v758
      %v951 = vunpack.c.l.b16 %v759
      %v952 = vunpack.c.l.b16 %v760
      %v953 = vunpack.c.l.b16 %v761
      %v954 = vunpack.c.l.b16 %v762
      %v955 = vunpack.c.l.b16 %v763
      %v956 = vunpack.c.l.b16 %v764
      %v957 = vunpack.c.l.b16 %v765
      %v958 = vunpack.c.l.b16 %v766
      %v959 = vunpack.c.l.b16 %v767
      %v960 = vunpack.c.l.b16 %v768
      %v961 = vunpack.c.l.b16 %v769
      %v962 = vunpack.c.l.b16 %v770
      %v963 = vunpack.c.l.b16 %v771
      %v964 = vunpack.c.l.b16 %v772
      %v965 = vunpack.c.l.b16 %v773
      %v966 = vunpack.c.l.b16 %v774
      %v967 = vunpack.c.l.b16 %v775
      %v968 = vunpack.c.l.b16 %v776
      %v969 = vunpack.c.l.b16 %v777
      %v970 = vunpack.c.l.b16 %v778
      %v971 = vunpack.c.l.b16 %v779
      %v972 = vunpack.c.l.b16 %v780
      %v973 = vpack.c.b16 %v950, %v949
      %v974 = vpack.c.b16 %v952, %v951
      %v975 = vpack.c.b16 %v954, %v953
      %v976 = vpack.c.b16 %v956, %v955
      %v977 = vpack.c.b16 %v958, %v957
      %v978 = vpack.c.b16 %v960, %v959
      %v979 = vpack.c.b16 %v962, %v961
      %v980 = vpack.c.b16 %v964, %v963
      %v981 = vpack.c.b16 %v966, %v965
      %v982 = vpack.c.b16 %v968, %v967
      %v983 = vpack.c.b16 %v970, %v969
      %v984 = vpack.c.b16 %v972, %v971
      %v998 = vsel %vm472, %v878, 0
      %v1001 = vsel %vm472, %v880, 0
      %v1004 = vsel %vm472, %v882, 0
      %v1007 = vsel %vm472, %v884, 0
      %v1010 = vsel %vm472, %v886, 0
      %v1013 = vsel %vm472, %v888, 0
      %v1016 = vsel %vm472, %v890, 0
      %v1019 = vsel %vm472, %v892, 0
      %v1022 = vsel %vm472, %v894, 0
      %v1025 = vsel %vm472, %v896, 0
      %v1028 = vsel %vm472, %v898, 0
      %v1031 = vsel %vm472, %v900, 0
      %v1034 = vsel %vm472, %v902, 0
      %v1037 = vsel %vm472, %v904, 0
      %v1040 = vsel %vm472, %v906, 0
      %v1043 = vsel %vm472, %v908, 0
      %1045 = vmatprep.subr.bf16.mxu0 0
      %1046 = vmatpush1.bf16.msra.mxu0 %v973
      %1047 = vmatprep.subr.bf16.mxu0 0
      %1048 = vmatpush1.bf16.msra.mxu0 %v974
      %1049 = vmatprep.subr.bf16.mxu0 0
      %1050 = vmatpush1.bf16.msra.mxu0 %v975
      %1051 = vmatprep.subr.bf16.mxu0 0
      %1052 = vmatpush1.bf16.msra.mxu0 %v976
      %1053 = vmatprep.subr.bf16.mxu0 0
      %1054 = vmatpush1.bf16.msra.mxu0 %v977
      %1055 = vmatprep.subr.bf16.mxu0 0
      %1056 = vmatpush1.bf16.msra.mxu0 %v978
      %1057 = vmatprep.subr.bf16.mxu0 0
      %1058 = vmatpush1.bf16.msra.mxu0 %v979
      %1059 = vmatprep.subr.bf16.mxu0 0
      %1060 = vmatpush1.bf16.msra.mxu0 %v980
      %1061 = vmatprep.subr.bf16.mxu0 0
      %1062 = vmatpush1.bf16.msra.mxu0 %v981
      %1063 = vmatprep.subr.bf16.mxu0 0
      %1064 = vmatpush1.bf16.msra.mxu0 %v982
      %1065 = vmatprep.subr.bf16.mxu0 0
      %1066 = vmatpush1.bf16.msra.mxu0 %v983
      %1067 = vmatprep.subr.bf16.mxu0 0
      %1068 = vmatpush1.bf16.msra.mxu0 %v984
      %1069 = vmatprep.subr.bf16.mxu0 0
      %1070 = vmatpush1.bf16.msra.mxu0 0
      %1071 = vmatprep.subr.bf16.mxu0 0
      %1072 = vmatpush1.bf16.msra.mxu0 0
      %1073 = vmatprep.subr.bf16.mxu0 0
      %1074 = vmatpush1.bf16.msra.mxu0 0
      %1075 = vmatprep.subr.bf16.mxu0 0
      %1076 = vmatpush1.bf16.msra.mxu0 0
      %1077 = vmatprep.mubr.bf16.mxu0 %v998
      %1078 = vmatmul.mubr.bf16.gmra.mrb[0].mxu0 %v877
      %v1079 = vpop.f32.mrb[0].mxu0
      %v1080 = vadd.f32 0.0, %v1079
      %v1081 = vpop.f32.mrb[0].mxu0
      %v1082 = vpop.f32.mrb[0].mxu0
      %v1083 = vadd.f32 0.0, %v1082
      %v1084 = vpop.f32.mrb[0].mxu0
      %1085 = vmatprep.mubr.bf16.mxu0 %v1001
      %1086 = vmatmul.mubr.bf16.gmra.mrb[0].mxu0 %v879
      %v1087 = vpop.f32.mrb[0].mxu0
      %v1088 = vadd.f32 0.0, %v1087
      %v1089 = vpop.f32.mrb[0].mxu0
      %v1090 = vpop.f32.mrb[0].mxu0
      %v1091 = vadd.f32 0.0, %v1090
      %v1092 = vpop.f32.mrb[0].mxu0
      %1093 = vmatprep.mubr.bf16.mxu0 %v1004
      %1094 = vmatmul.mubr.bf16.gmra.mrb[0].mxu0 %v881
      %v1095 = vpop.f32.mrb[0].mxu0
      %v1096 = vadd.f32 0.0, %v1095
      %v1097 = vpop.f32.mrb[0].mxu0
      %v1098 = vpop.f32.mrb[0].mxu0
      %v1099 = vadd.f32 0.0, %v1098
      %v1100 = vpop.f32.mrb[0].mxu0
      %1101 = vmatprep.mubr.bf16.mxu0 %v1007
      %1102 = vmatmul.mubr.bf16.gmra.mrb[0].mxu0 %v883
      %v1103 = vpop.f32.mrb[0].mxu0
      %v1104 = vadd.f32 0.0, %v1103
      %v1105 = vpop.f32.mrb[0].mxu0
      %v1106 = vpop.f32.mrb[0].mxu0
      %v1107 = vadd.f32 0.0, %v1106
      %v1108 = vpop.f32.mrb[0].mxu0
      %1109 = vmatprep.mubr.bf16.mxu0 %v1010
      %1110 = vmatmul.mubr.bf16.gmra.mrb[0].mxu0 %v885
      %v1111 = vpop.f32.mrb[0].mxu0
      %v1112 = vadd.f32 0.0, %v1111
      %v1113 = vpop.f32.mrb[0].mxu0
      %v1114 = vpop.f32.mrb[0].mxu0
      %v1115 = vadd.f32 0.0, %v1114
      %v1116 = vpop.f32.mrb[0].mxu0
      %1117 = vmatprep.mubr.bf16.mxu0 %v1013
      %1118 = vmatmul.mubr.bf16.gmra.mrb[0].mxu0 %v887
      %v1119 = vpop.f32.mrb[0].mxu0
      %v1120 = vadd.f32 0.0, %v1119
      %v1121 = vpop.f32.mrb[0].mxu0
      %v1122 = vpop.f32.mrb[0].mxu0
      %v1123 = vadd.f32 0.0, %v1122
      %v1124 = vpop.f32.mrb[0].mxu0
      %1125 = vmatprep.mubr.bf16.mxu0 %v1016
      %1126 = vmatmul.mubr.bf16.gmra.mrb[0].mxu0 %v889
      %v1127 = vpop.f32.mrb[0].mxu0
      %v1128 = vadd.f32 0.0, %v1127
      %v1129 = vpop.f32.mrb[0].mxu0
      %v1130 = vpop.f32.mrb[0].mxu0
      %v1131 = vadd.f32 0.0, %v1130
      %v1132 = vpop.f32.mrb[0].mxu0
      %1133 = vmatprep.mubr.bf16.mxu0 %v1019
      %1134 = vmatmul.mubr.bf16.gmra.mrb[0].mxu0 %v891
      %v1135 = vpop.f32.mrb[0].mxu0
      %v1136 = vadd.f32 0.0, %v1135
      %v1137 = vpop.f32.mrb[0].mxu0
      %v1138 = vpop.f32.mrb[0].mxu0
      %v1139 = vadd.f32 0.0, %v1138
      %v1140 = vpop.f32.mrb[0].mxu0
      %1141 = vmatprep.mubr.bf16.mxu0 %v1022
      %1142 = vmatmul.mubr.bf16.gmra.mrb[0].mxu0 %v893
      %v1143 = vpop.f32.mrb[0].mxu0
      %v1144 = vadd.f32 0.0, %v1143
      %v1145 = vpop.f32.mrb[0].mxu0
      %v1146 = vpop.f32.mrb[0].mxu0
      %v1147 = vadd.f32 0.0, %v1146
      %v1148 = vpop.f32.mrb[0].mxu0
      %1149 = vmatprep.mubr.bf16.mxu0 %v1025
      %1150 = vmatmul.mubr.bf16.gmra.mrb[0].mxu0 %v895
      %v1151 = vpop.f32.mrb[0].mxu0
      %v1152 = vadd.f32 0.0, %v1151
      %v1153 = vpop.f32.mrb[0].mxu0
      %v1154 = vpop.f32.mrb[0].mxu0
      %v1155 = vadd.f32 0.0, %v1154
      %v1156 = vpop.f32.mrb[0].mxu0
      %1157 = vmatprep.mubr.bf16.mxu0 %v1028
      %1158 = vmatmul.mubr.bf16.gmra.mrb[0].mxu0 %v897
      %v1159 = vpop.f32.mrb[0].mxu0
      %v1160 = vadd.f32 0.0, %v1159
      %v1161 = vpop.f32.mrb[0].mxu0
      %v1162 = vpop.f32.mrb[0].mxu0
      %v1163 = vadd.f32 0.0, %v1162
      %v1164 = vpop.f32.mrb[0].mxu0
      %1165 = vmatprep.mubr.bf16.mxu0 %v1031
      %1166 = vmatmul.mubr.bf16.gmra.mrb[0].mxu0 %v899
      %v1167 = vpop.f32.mrb[0].mxu0
      %v1168 = vadd.f32 0.0, %v1167
      %v1169 = vpop.f32.mrb[0].mxu0
      %v1170 = vpop.f32.mrb[0].mxu0
      %v1171 = vadd.f32 0.0, %v1170
      %v1172 = vpop.f32.mrb[0].mxu0
      %1173 = vmatprep.mubr.bf16.mxu0 %v1034
      %1174 = vmatmul.mubr.bf16.gmra.mrb[0].mxu0 %v901
      %v1175 = vpop.f32.mrb[0].mxu0
      %v1176 = vadd.f32 0.0, %v1175
      %v1177 = vpop.f32.mrb[0].mxu0
      %v1178 = vpop.f32.mrb[0].mxu0
      %v1179 = vadd.f32 0.0, %v1178
      %v1180 = vpop.f32.mrb[0].mxu0
      %1181 = vmatprep.mubr.bf16.mxu0 %v1037
      %1182 = vmatmul.mubr.bf16.gmra.mrb[0].mxu0 %v903
      %v1183 = vpop.f32.mrb[0].mxu0
      %v1184 = vadd.f32 0.0, %v1183
      %v1185 = vpop.f32.mrb[0].mxu0
      %v1186 = vpop.f32.mrb[0].mxu0
      %v1187 = vadd.f32 0.0, %v1186
      %v1188 = vpop.f32.mrb[0].mxu0
      %1189 = vmatprep.mubr.bf16.mxu0 %v1040
      %1190 = vmatmul.mubr.bf16.gmra.mrb[0].mxu0 %v905
      %v1191 = vpop.f32.mrb[0].mxu0
      %v1192 = vadd.f32 0.0, %v1191
      %v1193 = vpop.f32.mrb[0].mxu0
      %v1194 = vpop.f32.mrb[0].mxu0
      %v1195 = vadd.f32 0.0, %v1194
      %v1196 = vpop.f32.mrb[0].mxu0
      %1197 = vmatprep.mubr.bf16.mxu0 %v1043
      %1198 = vmatmul.mubr.bf16.gmra.mrb[0].mxu0 %v907
      %v1199 = vpop.f32.mrb[0].mxu0
      %v1200 = vadd.f32 0.0, %v1199
      %v1201 = vpop.f32.mrb[0].mxu0
      %v1202 = vpop.f32.mrb[0].mxu0
      %v1203 = vadd.f32 0.0, %v1202
      %v1204 = vpop.f32.mrb[0].mxu0
      %1205 = vdwg.mxu0
      %v1206 = vadd.f32 %v688, %v1080
      %v1207 = vadd.f32 %v689, %v1083
      %v1208 = vadd.f32 %v690, %v1088
      %v1209 = vadd.f32 %v691, %v1091
      %v1210 = vadd.f32 %v692, %v1096
      %v1211 = vadd.f32 %v693, %v1099
      %v1212 = vadd.f32 %v694, %v1104
      %v1213 = vadd.f32 %v695, %v1107
      %v1214 = vadd.f32 %v696, %v1112
      %v1215 = vadd.f32 %v697, %v1115
      %v1216 = vadd.f32 %v698, %v1120
      %v1217 = vadd.f32 %v699, %v1123
      %v1218 = vadd.f32 %v700, %v1128
      %v1219 = vadd.f32 %v701, %v1131
      %v1220 = vadd.f32 %v702, %v1136
      %v1221 = vadd.f32 %v703, %v1139
      %v1222 = vadd.f32 %v704, %v1144
      %v1223 = vadd.f32 %v705, %v1147
      %v1224 = vadd.f32 %v706, %v1152
      %v1225 = vadd.f32 %v707, %v1155
      %v1226 = vadd.f32 %v708, %v1160
      %v1227 = vadd.f32 %v709, %v1163
      %v1228 = vadd.f32 %v710, %v1168
      %v1229 = vadd.f32 %v711, %v1171
      %v1230 = vadd.f32 %v712, %v1176
      %v1231 = vadd.f32 %v713, %v1179
      %v1232 = vadd.f32 %v714, %v1184
      %v1233 = vadd.f32 %v715, %v1187
      %v1234 = vadd.f32 %v716, %v1192
      %v1235 = vadd.f32 %v717, %v1195
      %v1236 = vadd.f32 %v718, %v1200
      %v1237 = vadd.f32 %v719, %v1203
      %s1238 = sadd.s32 %s196, 2
      %s1239 = smul.u32 %s1238, 4
      %s1240 = smul.addr %s1239, 4
      %s1241 = scalar_lea.vmem %s183, %s1240
      %v1242 = vld [vmem:[%s1241] sm:$0xff]
      %v1243 = vld [vmem:[%s1241 + $0x8] sm:$0xff]
      %v1244 = vld [vmem:[%s1241 + $0x10] sm:$0xff]
      %v1245 = vld [vmem:[%s1241 + $0x18] sm:$0xff]
      %v1246 = vld [vmem:[%s1241 + $0x20] sm:$0xff]
      %v1247 = vld [vmem:[%s1241 + $0x28] sm:$0xff]
      %v1248 = vld [vmem:[%s1241 + $0x30] sm:$0xff]
      %v1249 = vld [vmem:[%s1241 + $0x38] sm:$0xff]
      %v1250 = vld [vmem:[%s1241 + $0x40] sm:$0xff]
      %v1251 = vld [vmem:[%s1241 + $0x48] sm:$0xff]
      %v1252 = vld [vmem:[%s1241 + $0x50] sm:$0xff]
      %v1253 = vld [vmem:[%s1241 + $0x58] sm:$0xff]
      %v1254 = vld [vmem:[%s1241 + $0x60] sm:$0xff]
      %v1255 = vld [vmem:[%s1241 + $0x68] sm:$0xff]
      %v1256 = vld [vmem:[%s1241 + $0x70] sm:$0xff]
      %v1257 = vld [vmem:[%s1241 + $0x78] sm:$0xff]
      %v1258 = vld [vmem:[%s1241 + $0x80] sm:$0xff]
      %v1259 = vld [vmem:[%s1241 + $0x88] sm:$0xff]
      %v1260 = vld [vmem:[%s1241 + $0x90] sm:$0xff]
      %v1261 = vld [vmem:[%s1241 + $0x98] sm:$0xff]
      %v1262 = vld [vmem:[%s1241 + $0xa0] sm:$0xff]
      %v1263 = vld [vmem:[%s1241 + $0xa8] sm:$0xff]
      %v1264 = vld [vmem:[%s1241 + $0xb0] sm:$0xff]
      %v1265 = vld [vmem:[%s1241 + $0xb8] sm:$0xff]
      %v1266 = vld [vmem:[%s1241 + $0xc0] sm:$0xff]
      %v1267 = vld [vmem:[%s1241 + $0xc8] sm:$0xff]
      %v1268 = vld [vmem:[%s1241 + $0xd0] sm:$0xff]
      %v1269 = vld [vmem:[%s1241 + $0xd8] sm:$0xff]
      %v1270 = vld [vmem:[%s1241 + $0xe0] sm:$0xff]
      %v1271 = vld [vmem:[%s1241 + $0xe8] sm:$0xff]
      %v1272 = vld [vmem:[%s1241 + $0xf0] sm:$0xff]
      %v1273 = vld [vmem:[%s1241 + $0xf8] sm:$0xff]
      %s1274 = scalar_lea.vmem %s1, 192
      %v1275 = vld [vmem:[%s1274] sm:$0xf]
      %v1276 = vld [vmem:[%s1274 + $0x4] sm:$0xf]
      %v1277 = vld [vmem:[%s1274 + $0x8] sm:$0xf]
      %v1278 = vld [vmem:[%s1274 + $0xc] sm:$0xf]
      %v1279 = vld [vmem:[%s1274 + $0x10] sm:$0xf]
      %v1280 = vld [vmem:[%s1274 + $0x14] sm:$0xf]
      %v1281 = vld [vmem:[%s1274 + $0x18] sm:$0xf]
      %v1282 = vld [vmem:[%s1274 + $0x1c] sm:$0xf]
      %v1283 = vld [vmem:[%s1274 + $0x20] sm:$0xf]
      %v1284 = vld [vmem:[%s1274 + $0x24] sm:$0xf]
      %v1285 = vld [vmem:[%s1274 + $0x28] sm:$0xf]
      %v1286 = vld [vmem:[%s1274 + $0x2c] sm:$0xf]
      %v1287 = vld [vmem:[%s1274 + $0x30] sm:$0xf]
      %v1288 = vld [vmem:[%s1274 + $0x34] sm:$0xf]
      %v1289 = vld [vmem:[%s1274 + $0x38] sm:$0xf]
      %v1290 = vld [vmem:[%s1274 + $0x3c] sm:$0xf]
      %v1291 = vld [vmem:[%s1274 + $0x40] sm:$0xf]
      %v1292 = vld [vmem:[%s1274 + $0x44] sm:$0xf]
      %v1293 = vld [vmem:[%s1274 + $0x48] sm:$0xf]
      %v1294 = vld [vmem:[%s1274 + $0x4c] sm:$0xf]
      %v1295 = vld [vmem:[%s1274 + $0x50] sm:$0xf]
      %v1296 = vld [vmem:[%s1274 + $0x54] sm:$0xf]
      %v1297 = vld [vmem:[%s1274 + $0x58] sm:$0xf]
      %v1298 = vld [vmem:[%s1274 + $0x5c] sm:$0xf]
      %v1331 = vunpack.c.l.b16 %v1242
      %v1332 = vunpack.c.h.b16 %v1242
      %v1333 = vunpack.c.l.b16 %v1243
      %v1334 = vunpack.c.h.b16 %v1243
      %v1335 = vunpack.c.l.b16 %v1244
      %v1336 = vunpack.c.h.b16 %v1244
      %v1337 = vunpack.c.l.b16 %v1245
      %v1338 = vunpack.c.h.b16 %v1245
      %v1339 = vunpack.c.l.b16 %v1246
      %v1340 = vunpack.c.h.b16 %v1246
      %v1341 = vunpack.c.l.b16 %v1247
      %v1342 = vunpack.c.h.b16 %v1247
      %v1343 = vunpack.c.l.b16 %v1248
      %v1344 = vunpack.c.h.b16 %v1248
      %v1345 = vunpack.c.l.b16 %v1249
      %v1346 = vunpack.c.h.b16 %v1249
      %v1347 = vunpack.c.l.b16 %v1250
      %v1348 = vunpack.c.h.b16 %v1250
      %v1349 = vunpack.c.l.b16 %v1251
      %v1350 = vunpack.c.h.b16 %v1251
      %v1351 = vunpack.c.l.b16 %v1252
      %v1352 = vunpack.c.h.b16 %v1252
      %v1353 = vunpack.c.l.b16 %v1253
      %v1354 = vunpack.c.h.b16 %v1253
      %v1355 = vunpack.c.l.b16 %v1254
      %v1356 = vunpack.c.h.b16 %v1254
      %v1357 = vunpack.c.l.b16 %v1255
      %v1358 = vunpack.c.h.b16 %v1255
      %v1359 = vunpack.c.l.b16 %v1256
      %v1360 = vunpack.c.h.b16 %v1256
      %v1361 = vunpack.c.l.b16 %v1257
      %v1362 = vunpack.c.h.b16 %v1257
      %v1363 = vunpack.c.l.b16 %v1258
      %v1364 = vunpack.c.h.b16 %v1258
      %v1365 = vunpack.c.l.b16 %v1259
      %v1366 = vunpack.c.h.b16 %v1259
      %v1367 = vunpack.c.l.b16 %v1260
      %v1368 = vunpack.c.h.b16 %v1260
      %v1369 = vunpack.c.l.b16 %v1261
      %v1370 = vunpack.c.h.b16 %v1261
      %v1371 = vunpack.c.l.b16 %v1262
      %v1372 = vunpack.c.h.b16 %v1262
      %v1373 = vunpack.c.l.b16 %v1263
      %v1374 = vunpack.c.h.b16 %v1263
      %v1375 = vunpack.c.l.b16 %v1264
      %v1376 = vunpack.c.h.b16 %v1264
      %v1377 = vunpack.c.l.b16 %v1265
      %v1378 = vunpack.c.h.b16 %v1265
      %v1379 = vunpack.c.l.b16 %v1266
      %v1380 = vunpack.c.h.b16 %v1266
      %v1381 = vunpack.c.l.b16 %v1267
      %v1382 = vunpack.c.h.b16 %v1267
      %v1383 = vunpack.c.l.b16 %v1268
      %v1384 = vunpack.c.h.b16 %v1268
      %v1385 = vunpack.c.l.b16 %v1269
      %v1386 = vunpack.c.h.b16 %v1269
      %v1387 = vunpack.c.l.b16 %v1270
      %v1388 = vunpack.c.h.b16 %v1270
      %v1389 = vunpack.c.l.b16 %v1271
      %v1390 = vunpack.c.h.b16 %v1271
      %v1391 = vunpack.c.l.b16 %v1272
      %v1392 = vunpack.c.h.b16 %v1272
      %v1393 = vunpack.c.l.b16 %v1273
      %v1394 = vunpack.c.h.b16 %v1273
      %v1395 = vpack.c.b16 %v1333, %v1331
      %v1396 = vpack.c.b16 %v1334, %v1332
      %v1397 = vpack.c.b16 %v1337, %v1335
      %v1398 = vpack.c.b16 %v1338, %v1336
      %v1399 = vpack.c.b16 %v1341, %v1339
      %v1400 = vpack.c.b16 %v1342, %v1340
      %v1401 = vpack.c.b16 %v1345, %v1343
      %v1402 = vpack.c.b16 %v1346, %v1344
      %v1403 = vpack.c.b16 %v1349, %v1347
      %v1404 = vpack.c.b16 %v1350, %v1348
      %v1405 = vpack.c.b16 %v1353, %v1351
      %v1406 = vpack.c.b16 %v1354, %v1352
      %v1407 = vpack.c.b16 %v1357, %v1355
      %v1408 = vpack.c.b16 %v1358, %v1356
      %v1409 = vpack.c.b16 %v1361, %v1359
      %v1410 = vpack.c.b16 %v1362, %v1360
      %v1411 = vpack.c.b16 %v1365, %v1363
      %v1412 = vpack.c.b16 %v1366, %v1364
      %v1413 = vpack.c.b16 %v1369, %v1367
      %v1414 = vpack.c.b16 %v1370, %v1368
      %v1415 = vpack.c.b16 %v1373, %v1371
      %v1416 = vpack.c.b16 %v1374, %v1372
      %v1417 = vpack.c.b16 %v1377, %v1375
      %v1418 = vpack.c.b16 %v1378, %v1376
      %v1419 = vpack.c.b16 %v1381, %v1379
      %v1420 = vpack.c.b16 %v1382, %v1380
      %v1421 = vpack.c.b16 %v1385, %v1383
      %v1422 = vpack.c.b16 %v1386, %v1384
      %v1423 = vpack.c.b16 %v1389, %v1387
      %v1424 = vpack.c.b16 %v1390, %v1388
      %v1425 = vpack.c.b16 %v1393, %v1391
      %v1426 = vpack.c.b16 %v1394, %v1392
      %v1467 = vunpack.c.l.b16 %v1275
      %v1468 = vunpack.c.l.b16 %v1276
      %v1469 = vunpack.c.l.b16 %v1277
      %v1470 = vunpack.c.l.b16 %v1278
      %v1471 = vunpack.c.l.b16 %v1279
      %v1472 = vunpack.c.l.b16 %v1280
      %v1473 = vunpack.c.l.b16 %v1281
      %v1474 = vunpack.c.l.b16 %v1282
      %v1475 = vunpack.c.l.b16 %v1283
      %v1476 = vunpack.c.l.b16 %v1284
      %v1477 = vunpack.c.l.b16 %v1285
      %v1478 = vunpack.c.l.b16 %v1286
      %v1479 = vunpack.c.l.b16 %v1287
      %v1480 = vunpack.c.l.b16 %v1288
      %v1481 = vunpack.c.l.b16 %v1289
      %v1482 = vunpack.c.l.b16 %v1290
      %v1483 = vunpack.c.l.b16 %v1291
      %v1484 = vunpack.c.l.b16 %v1292
      %v1485 = vunpack.c.l.b16 %v1293
      %v1486 = vunpack.c.l.b16 %v1294
      %v1487 = vunpack.c.l.b16 %v1295
      %v1488 = vunpack.c.l.b16 %v1296
      %v1489 = vunpack.c.l.b16 %v1297
      %v1490 = vunpack.c.l.b16 %v1298
      %v1491 = vpack.c.b16 %v1468, %v1467
      %v1492 = vpack.c.b16 %v1470, %v1469
      %v1493 = vpack.c.b16 %v1472, %v1471
      %v1494 = vpack.c.b16 %v1474, %v1473
      %v1495 = vpack.c.b16 %v1476, %v1475
      %v1496 = vpack.c.b16 %v1478, %v1477
      %v1497 = vpack.c.b16 %v1480, %v1479
      %v1498 = vpack.c.b16 %v1482, %v1481
      %v1499 = vpack.c.b16 %v1484, %v1483
      %v1500 = vpack.c.b16 %v1486, %v1485
      %v1501 = vpack.c.b16 %v1488, %v1487
      %v1502 = vpack.c.b16 %v1490, %v1489
      %v1516 = vsel %vm472, %v1396, 0
      %v1519 = vsel %vm472, %v1398, 0
      %v1522 = vsel %vm472, %v1400, 0
      %v1525 = vsel %vm472, %v1402, 0
      %v1528 = vsel %vm472, %v1404, 0
      %v1531 = vsel %vm472, %v1406, 0
      %v1534 = vsel %vm472, %v1408, 0
      %v1537 = vsel %vm472, %v1410, 0
      %v1540 = vsel %vm472, %v1412, 0
      %v1543 = vsel %vm472, %v1414, 0
      %v1546 = vsel %vm472, %v1416, 0
      %v1549 = vsel %vm472, %v1418, 0
      %v1552 = vsel %vm472, %v1420, 0
      %v1555 = vsel %vm472, %v1422, 0
      %v1558 = vsel %vm472, %v1424, 0
      %v1561 = vsel %vm472, %v1426, 0
      %1563 = vmatprep.subr.bf16.mxu0 0
      %1564 = vmatpush1.bf16.msra.mxu0 %v1491
      %1565 = vmatprep.subr.bf16.mxu0 0
      %1566 = vmatpush1.bf16.msra.mxu0 %v1492
      %1567 = vmatprep.subr.bf16.mxu0 0
      %1568 = vmatpush1.bf16.msra.mxu0 %v1493
      %1569 = vmatprep.subr.bf16.mxu0 0
      %1570 = vmatpush1.bf16.msra.mxu0 %v1494
      %1571 = vmatprep.subr.bf16.mxu0 0
      %1572 = vmatpush1.bf16.msra.mxu0 %v1495
      %1573 = vmatprep.subr.bf16.mxu0 0
      %1574 = vmatpush1.bf16.msra.mxu0 %v1496
      %1575 = vmatprep.subr.bf16.mxu0 0
      %1576 = vmatpush1.bf16.msra.mxu0 %v1497
      %1577 = vmatprep.subr.bf16.mxu0 0
      %1578 = vmatpush1.bf16.msra.mxu0 %v1498
      %1579 = vmatprep.subr.bf16.mxu0 0
      %1580 = vmatpush1.bf16.msra.mxu0 %v1499
      %1581 = vmatprep.subr.bf16.mxu0 0
      %1582 = vmatpush1.bf16.msra.mxu0 %v1500
      %1583 = vmatprep.subr.bf16.mxu0 0
      %1584 = vmatpush1.bf16.msra.mxu0 %v1501
      %1585 = vmatprep.subr.bf16.mxu0 0
      %1586 = vmatpush1.bf16.msra.mxu0 %v1502
      %1587 = vmatprep.subr.bf16.mxu0 0
      %1588 = vmatpush1.bf16.msra.mxu0 0
      %1589 = vmatprep.subr.bf16.mxu0 0
      %1590 = vmatpush1.bf16.msra.mxu0 0
      %1591 = vmatprep.subr.bf16.mxu0 0
      %1592 = vmatpush1.bf16.msra.mxu0 0
      %1593 = vmatprep.subr.bf16.mxu0 0
      %1594 = vmatpush1.bf16.msra.mxu0 0
      %1595 = vmatprep.mubr.bf16.mxu0 %v1516
      %1596 = vmatmul.mubr.bf16.gmra.mrb[0].mxu0 %v1395
      %v1597 = vpop.f32.mrb[0].mxu0
      %v1598 = vadd.f32 0.0, %v1597
      %v1599 = vpop.f32.mrb[0].mxu0
      %v1600 = vpop.f32.mrb[0].mxu0
      %v1601 = vadd.f32 0.0, %v1600
      %v1602 = vpop.f32.mrb[0].mxu0
      %1603 = vmatprep.mubr.bf16.mxu0 %v1519
      %1604 = vmatmul.mubr.bf16.gmra.mrb[0].mxu0 %v1397
      %v1605 = vpop.f32.mrb[0].mxu0
      %v1606 = vadd.f32 0.0, %v1605
      %v1607 = vpop.f32.mrb[0].mxu0
      %v1608 = vpop.f32.mrb[0].mxu0
      %v1609 = vadd.f32 0.0, %v1608
      %v1610 = vpop.f32.mrb[0].mxu0
      %1611 = vmatprep.mubr.bf16.mxu0 %v1522
      %1612 = vmatmul.mubr.bf16.gmra.mrb[0].mxu0 %v1399
      %v1613 = vpop.f32.mrb[0].mxu0
      %v1614 = vadd.f32 0.0, %v1613
      %v1615 = vpop.f32.mrb[0].mxu0
      %v1616 = vpop.f32.mrb[0].mxu0
      %v1617 = vadd.f32 0.0, %v1616
      %v1618 = vpop.f32.mrb[0].mxu0
      %1619 = vmatprep.mubr.bf16.mxu0 %v1525
      %1620 = vmatmul.mubr.bf16.gmra.mrb[0].mxu0 %v1401
      %v1621 = vpop.f32.mrb[0].mxu0
      %v1622 = vadd.f32 0.0, %v1621
      %v1623 = vpop.f32.mrb[0].mxu0
      %v1624 = vpop.f32.mrb[0].mxu0
      %v1625 = vadd.f32 0.0, %v1624
      %v1626 = vpop.f32.mrb[0].mxu0
      %1627 = vmatprep.mubr.bf16.mxu0 %v1528
      %1628 = vmatmul.mubr.bf16.gmra.mrb[0].mxu0 %v1403
      %v1629 = vpop.f32.mrb[0].mxu0
      %v1630 = vadd.f32 0.0, %v1629
      %v1631 = vpop.f32.mrb[0].mxu0
      %v1632 = vpop.f32.mrb[0].mxu0
      %v1633 = vadd.f32 0.0, %v1632
      %v1634 = vpop.f32.mrb[0].mxu0
      %1635 = vmatprep.mubr.bf16.mxu0 %v1531
      %1636 = vmatmul.mubr.bf16.gmra.mrb[0].mxu0 %v1405
      %v1637 = vpop.f32.mrb[0].mxu0
      %v1638 = vadd.f32 0.0, %v1637
      %v1639 = vpop.f32.mrb[0].mxu0
      %v1640 = vpop.f32.mrb[0].mxu0
      %v1641 = vadd.f32 0.0, %v1640
      %v1642 = vpop.f32.mrb[0].mxu0
      %1643 = vmatprep.mubr.bf16.mxu0 %v1534
      %1644 = vmatmul.mubr.bf16.gmra.mrb[0].mxu0 %v1407
      %v1645 = vpop.f32.mrb[0].mxu0
      %v1646 = vadd.f32 0.0, %v1645
      %v1647 = vpop.f32.mrb[0].mxu0
      %v1648 = vpop.f32.mrb[0].mxu0
      %v1649 = vadd.f32 0.0, %v1648
      %v1650 = vpop.f32.mrb[0].mxu0
      %1651 = vmatprep.mubr.bf16.mxu0 %v1537
      %1652 = vmatmul.mubr.bf16.gmra.mrb[0].mxu0 %v1409
      %v1653 = vpop.f32.mrb[0].mxu0
      %v1654 = vadd.f32 0.0, %v1653
      %v1655 = vpop.f32.mrb[0].mxu0
      %v1656 = vpop.f32.mrb[0].mxu0
      %v1657 = vadd.f32 0.0, %v1656
      %v1658 = vpop.f32.mrb[0].mxu0
      %1659 = vmatprep.mubr.bf16.mxu0 %v1540
      %1660 = vmatmul.mubr.bf16.gmra.mrb[0].mxu0 %v1411
      %v1661 = vpop.f32.mrb[0].mxu0
      %v1662 = vadd.f32 0.0, %v1661
      %v1663 = vpop.f32.mrb[0].mxu0
      %v1664 = vpop.f32.mrb[0].mxu0
      %v1665 = vadd.f32 0.0, %v1664
      %v1666 = vpop.f32.mrb[0].mxu0
      %1667 = vmatprep.mubr.bf16.mxu0 %v1543
      %1668 = vmatmul.mubr.bf16.gmra.mrb[0].mxu0 %v1413
      %v1669 = vpop.f32.mrb[0].mxu0
      %v1670 = vadd.f32 0.0, %v1669
      %v1671 = vpop.f32.mrb[0].mxu0
      %v1672 = vpop.f32.mrb[0].mxu0
      %v1673 = vadd.f32 0.0, %v1672
      %v1674 = vpop.f32.mrb[0].mxu0
      %1675 = vmatprep.mubr.bf16.mxu0 %v1546
      %1676 = vmatmul.mubr.bf16.gmra.mrb[0].mxu0 %v1415
      %v1677 = vpop.f32.mrb[0].mxu0
      %v1678 = vadd.f32 0.0, %v1677
      %v1679 = vpop.f32.mrb[0].mxu0
      %v1680 = vpop.f32.mrb[0].mxu0
      %v1681 = vadd.f32 0.0, %v1680
      %v1682 = vpop.f32.mrb[0].mxu0
      %1683 = vmatprep.mubr.bf16.mxu0 %v1549
      %1684 = vmatmul.mubr.bf16.gmra.mrb[0].mxu0 %v1417
      %v1685 = vpop.f32.mrb[0].mxu0
      %v1686 = vadd.f32 0.0, %v1685
      %v1687 = vpop.f32.mrb[0].mxu0
      %v1688 = vpop.f32.mrb[0].mxu0
      %v1689 = vadd.f32 0.0, %v1688
      %v1690 = vpop.f32.mrb[0].mxu0
      %1691 = vmatprep.mubr.bf16.mxu0 %v1552
      %1692 = vmatmul.mubr.bf16.gmra.mrb[0].mxu0 %v1419
      %v1693 = vpop.f32.mrb[0].mxu0
      %v1694 = vadd.f32 0.0, %v1693
      %v1695 = vpop.f32.mrb[0].mxu0
      %v1696 = vpop.f32.mrb[0].mxu0
      %v1697 = vadd.f32 0.0, %v1696
      %v1698 = vpop.f32.mrb[0].mxu0
      %1699 = vmatprep.mubr.bf16.mxu0 %v1555
      %1700 = vmatmul.mubr.bf16.gmra.mrb[0].mxu0 %v1421
      %v1701 = vpop.f32.mrb[0].mxu0
      %v1702 = vadd.f32 0.0, %v1701
      %v1703 = vpop.f32.mrb[0].mxu0
      %v1704 = vpop.f32.mrb[0].mxu0
      %v1705 = vadd.f32 0.0, %v1704
      %v1706 = vpop.f32.mrb[0].mxu0
      %1707 = vmatprep.mubr.bf16.mxu0 %v1558
      %1708 = vmatmul.mubr.bf16.gmra.mrb[0].mxu0 %v1423
      %v1709 = vpop.f32.mrb[0].mxu0
      %v1710 = vadd.f32 0.0, %v1709
      %v1711 = vpop.f32.mrb[0].mxu0
      %v1712 = vpop.f32.mrb[0].mxu0
      %v1713 = vadd.f32 0.0, %v1712
      %v1714 = vpop.f32.mrb[0].mxu0
      %1715 = vmatprep.mubr.bf16.mxu0 %v1561
      %1716 = vmatmul.mubr.bf16.gmra.mrb[0].mxu0 %v1425
      %v1717 = vpop.f32.mrb[0].mxu0
      %v1718 = vadd.f32 0.0, %v1717
      %v1719 = vpop.f32.mrb[0].mxu0
      %v1720 = vpop.f32.mrb[0].mxu0
      %v1721 = vadd.f32 0.0, %v1720
      %v1722 = vpop.f32.mrb[0].mxu0
      %1723 = vdwg.mxu0
      %v1724 = vadd.f32 %v1206, %v1598
      %v1725 = vadd.f32 %v1207, %v1601
      %v1726 = vadd.f32 %v1208, %v1606
      %v1727 = vadd.f32 %v1209, %v1609
      %v1728 = vadd.f32 %v1210, %v1614
      %v1729 = vadd.f32 %v1211, %v1617
      %v1730 = vadd.f32 %v1212, %v1622
      %v1731 = vadd.f32 %v1213, %v1625
      %v1732 = vadd.f32 %v1214, %v1630
      %v1733 = vadd.f32 %v1215, %v1633
      %v1734 = vadd.f32 %v1216, %v1638
      %v1735 = vadd.f32 %v1217, %v1641
      %v1736 = vadd.f32 %v1218, %v1646
      %v1737 = vadd.f32 %v1219, %v1649
      %v1738 = vadd.f32 %v1220, %v1654
      %v1739 = vadd.f32 %v1221, %v1657
      %v1740 = vadd.f32 %v1222, %v1662
      %v1741 = vadd.f32 %v1223, %v1665
      %v1742 = vadd.f32 %v1224, %v1670
      %v1743 = vadd.f32 %v1225, %v1673
      %v1744 = vadd.f32 %v1226, %v1678
      %v1745 = vadd.f32 %v1227, %v1681
      %v1746 = vadd.f32 %v1228, %v1686
      %v1747 = vadd.f32 %v1229, %v1689
      %v1748 = vadd.f32 %v1230, %v1694
      %v1749 = vadd.f32 %v1231, %v1697
      %v1750 = vadd.f32 %v1232, %v1702
      %v1751 = vadd.f32 %v1233, %v1705
      %v1752 = vadd.f32 %v1234, %v1710
      %v1753 = vadd.f32 %v1235, %v1713
      %v1754 = vadd.f32 %v1236, %v1718
      %v1755 = vadd.f32 %v1237, %v1721
      %1756 = vst [vmem:[%s192] sm:$0xff] %v1724
      %1757 = vst [vmem:[%s192 + $0x8] sm:$0xff] %v1725
      %1758 = vst [vmem:[%s192 + $0x10] sm:$0xff] %v1726
      %1759 = vst [vmem:[%s192 + $0x18] sm:$0xff] %v1727
      %1760 = vst [vmem:[%s192 + $0x20] sm:$0xff] %v1728
      %1761 = vst [vmem:[%s192 + $0x28] sm:$0xff] %v1729
      %1762 = vst [vmem:[%s192 + $0x30] sm:$0xff] %v1730
      %1763 = vst [vmem:[%s192 + $0x38] sm:$0xff] %v1731
      %1764 = vst [vmem:[%s192 + $0x40] sm:$0xff] %v1732
      %1765 = vst [vmem:[%s192 + $0x48] sm:$0xff] %v1733
      %1766 = vst [vmem:[%s192 + $0x50] sm:$0xff] %v1734
      %1767 = vst [vmem:[%s192 + $0x58] sm:$0xff] %v1735
      %1768 = vst [vmem:[%s192 + $0x60] sm:$0xff] %v1736
      %1769 = vst [vmem:[%s192 + $0x68] sm:$0xff] %v1737
      %1770 = vst [vmem:[%s192 + $0x70] sm:$0xff] %v1738
      %1771 = vst [vmem:[%s192 + $0x78] sm:$0xff] %v1739
      %1772 = vst [vmem:[%s192 + $0x80] sm:$0xff] %v1740
      %1773 = vst [vmem:[%s192 + $0x88] sm:$0xff] %v1741
      %1774 = vst [vmem:[%s192 + $0x90] sm:$0xff] %v1742
      %1775 = vst [vmem:[%s192 + $0x98] sm:$0xff] %v1743
      %1776 = vst [vmem:[%s192 + $0xa0] sm:$0xff] %v1744
      %1777 = vst [vmem:[%s192 + $0xa8] sm:$0xff] %v1745
      %1778 = vst [vmem:[%s192 + $0xb0] sm:$0xff] %v1746
      %1779 = vst [vmem:[%s192 + $0xb8] sm:$0xff] %v1747
      %1780 = vst [vmem:[%s192 + $0xc0] sm:$0xff] %v1748
      %1781 = vst [vmem:[%s192 + $0xc8] sm:$0xff] %v1749
      %1782 = vst [vmem:[%s192 + $0xd0] sm:$0xff] %v1750
      %1783 = vst [vmem:[%s192 + $0xd8] sm:$0xff] %v1751
      %1784 = vst [vmem:[%s192 + $0xe0] sm:$0xff] %v1752
      %1785 = vst [vmem:[%s192 + $0xe8] sm:$0xff] %v1753
      %1786 = vst [vmem:[%s192 + $0xf0] sm:$0xff] %v1754
      %1787 = vst [vmem:[%s192 + $0xf8] sm:$0xff] %v1755
      %s1788 = smul.u32 32, %s19
      %p1789 = scmp.lt.s32.totalorder %s18, 1
      %s1790 = scalar_select %p1789, %s18, 1
      %p1791 = scmp.lt.s32.totalorder %s1788, 31
      %s1792 = scalar_select %p1791, %s1788, 31
      %s1793 = smul.addr %s1790, 32
      %s1794 = sadd.s32 %s1792, %s1793
      %s1795 = smul.addr %s1794, 8
      %s1796 = scalar_lea.vmem %s3, %s1795
      // Predicated region
      $region33: #{bidirectional_conv3d.1} parent=31 // pred_check
        %p1797 = pneg %p114
      $region34: #{bidirectional_conv3d.1} parent=31 // pred_check_branch
        %1799 = sbr.rel (%p1797) target = $region36
      $region35: #{bidirectional_conv3d.1} parent=31 // pred_region
        %s1800 = smul.u32 32, %s19
      $region36: #{bidirectional_conv3d.1} parent=31 // pred_fallthru
        _
    $region32: #{bidirectional_conv3d.1} parent=5 // pred_fallthru
      _
    %p1801 = scmp.le.s32.totalorder 2, %s9
    // Predicated region
    $region37: #{bidirectional_conv3d.1} parent=5 // pred_check
      %p1802 = pneg %p1801
    $region38: #{bidirectional_conv3d.1} parent=5 // pred_check_branch
      %1804 = sbr.rel (%p1802) target = $region40
    $region39: #{bidirectional_conv3d.1} parent=5 // pred_region
      %s1805 = ssub.s32 %s9, 2
      // Predicated region
      $region41: #{bidirectional_conv3d.1} parent=39 // pred_check
        %p1806 = pneg %p120
      $region42: #{bidirectional_conv3d.1} parent=39 // pred_check_branch
        %1808 = sbr.rel (%p1806) target = $region44
      $region43: #{bidirectional_conv3d.1} parent=39 // pred_region
        %s1809 = smul.u32 32, %s21
        %p1810 = scmp.lt.s32.totalorder %s20, 1
        %s1811 = scalar_select %p1810, %s20, 1
        %p1812 = scmp.lt.s32.totalorder %s1809, 31
        %s1813 = scalar_select %p1812, %s1809, 31
        %s1814 = smul.addr %s1811, 32
        %s1815 = sadd.s32 %s1813, %s1814
        %s1816 = smul.addr %s1815, 8
        %s1817 = scalar_lea.vmem %s3, %s1816
      $region44: #{bidirectional_conv3d.1} parent=39 // pred_fallthru
        _
    $region40: #{bidirectional_conv3d.1} parent=5 // pred_fallthru
      _
  $region6: #{bidirectional_conv3d.1} parent=0 // loop_footer
    %s13 = sadd.s32 1, %s9
  $region7: #{bidirectional_conv3d.1} parent=0 // loop_footer_branch
    %8 = sbr.rel target = $region3
  $region8: #{bidirectional_conv3d.1} parent=0 // loop_exit
    _

</llo_original>
